<compile_context>
chip_gen: v7x
topology: tpu7x:2x2x1
jax: 0.10.0
libtpu: 0.0.40
codegen_flags: <defaults>
</compile_context>

<pallas_src>
import jax
import jax.numpy as jnp
from jax.experimental import pallas as pl
from jax.experimental.pallas import tpu as pltpu

# "model_parameters" from the PyTorch code (small, self-consistent values)
HIDDEN = 32            # model_parameters.hidden_size
HEADS = 2              # model_parameters.attention_heads
HEAD_DIM = 16          # model_parameters.attention_dim (HEADS*HEAD_DIM == HIDDEN)
RANK = 4               # LoRA rank
FFN_DIM = 64           # FFN inner dim
SEQ = 8
BATCH = 2
LN_EPS = 1e-5          # torch.nn.LayerNorm default

LANE = 128
ATT_OUT = HEADS * HEAD_DIM          # 32
SCALE = 1.0 / float(HEAD_DIM) ** 0.5

# Weight-slab row offsets (every block zero-padded to 128 lanes; matmul blocks also
# zero-padded on the contraction dim so the 128-lane activations feed them directly).
ROW_QKV = 0                         # [Wq|Wk|Wv]^T : (32, 96)  -> (128, 128)
ROW_O = ROW_QKV + LANE              # Wo^T         : (32, 32)  -> ( 32, 128)
ROW_F1 = ROW_O + ATT_OUT            # W1^T         : (32, 64)  -> (128, 128)
ROW_F2 = ROW_F1 + LANE              # W2^T         : (64, 32)  -> (128, 128)
ROW_VEC = ROW_F2 + LANE             # biases / LN affine rows  -> (  8, 128)
W_ROWS = ROW_VEC + 8                # 424 (multiple of 8)

# Bias/affine row indices within the vec block.
VEC_BQKV, VEC_BO, VEC_G1, VEC_BE1, VEC_B1, VEC_B2, VEC_G2, VEC_BE2 = range(8)


def _layer_norm128(x, gamma, beta):
    """LayerNorm over a 128-lane slab whose lanes >= HIDDEN are zero.

    Divisor is HIDDEN (not 128); var = E[x^2] - mu^2 so the zero-padded lanes do not
    corrupt the statistics.  gamma/beta padded lanes are zero, so padded output
    lanes stay exactly zero.
    """
    inv_h = 1.0 / float(HIDDEN)
    mu = jnp.sum(x, axis=-1, keepdims=True) * inv_h
    ex2 = jnp.sum(x * x, axis=-1, keepdims=True) * inv_h
    var = ex2 - mu * mu
    return (x - mu) * jax.lax.rsqrt(var + LN_EPS) * gamma + beta


def lora_decoder_kernel(x_ref, am_ref, w_ref, out_ref):
    B, S, _ = x_ref.shape
    D = HEAD_DIM
    f32 = jnp.float32

    x = x_ref[...]                              # (B, S, 128), lanes HIDDEN:128 == 0
    xf = x.reshape(B * S, LANE)                 # free leading-dim merge
    vec = w_ref[ROW_VEC:ROW_VEC + 8, :]         # (8, 128) biases / LN affine

    # Fused QKV projection (LoRA folded host-side).  Padded output lanes 96:128 stay 0.
    qkv = jnp.dot(xf, w_ref[ROW_QKV:ROW_QKV + LANE, :],
                  preferred_element_type=f32) + vec[VEC_BQKV:VEC_BQKV + 1, :]
    qkv = qkv.reshape(B, S, LANE)

    am = am_ref[...]                            # (B, S, S) additive mask (0 / -1e9)

    # Attention: static unroll over 2 heads, einsums batched over B.
    # Output projection accumulated per head -> no per-head context concatenation.
    proj = jnp.broadcast_to(vec[VEC_BO:VEC_BO + 1, :], (B * S, LANE))
    probs = []
    for h in range(HEADS):
        qh = qkv[:, :, h * D:(h + 1) * D]                                 # (B, S, D)
        kh = qkv[:, :, ATT_OUT + h * D:ATT_OUT + (h + 1) * D]
        vh = qkv[:, :, 2 * ATT_OUT + h * D:2 * ATT_OUT + (h + 1) * D]
        s = jnp.einsum('bqd,bkd->bqk', qh, kh,
                       preferred_element_type=f32) * SCALE + am          # (B, S, S)
        s = s - jnp.max(s, axis=-1, keepdims=True)
        e = jnp.exp(s)
        p = e * pl.reciprocal(jnp.sum(e, axis=-1, keepdims=True), approx=True)
        probs.append(p.reshape(B * S, S))
        ctx_h = jnp.einsum('bqk,bkd->bqd', p, vh,
                           preferred_element_type=f32).reshape(B * S, D)
        proj = proj + jnp.dot(ctx_h, w_ref[ROW_O + h * D:ROW_O + (h + 1) * D, :],
                              preferred_element_type=f32)

    # Attention output + residual + LayerNorm (full 128-lane path, no lane slices).
    y = _layer_norm128(proj + xf,
                       vec[VEC_G1:VEC_G1 + 1, :], vec[VEC_BE1:VEC_BE1 + 1, :])

    # TODO(synk): decoder_layer.fnn internals are not shown in the reference; assumed
    # standard transformer FFN: Linear -> ReLU -> Linear -> +residual -> LayerNorm.
    h1 = jnp.maximum(
        jnp.dot(y, w_ref[ROW_F1:ROW_F1 + LANE, :], preferred_element_type=f32)
        + vec[VEC_B1:VEC_B1 + 1, :], 0.0)                                  # (B*S, 128)
    f = jnp.dot(h1, w_ref[ROW_F2:ROW_F2 + LANE, :],
                preferred_element_type=f32) + vec[VEC_B2:VEC_B2 + 1, :]
    out = _layer_norm128(f + y,
                         vec[VEC_G2:VEC_G2 + 1, :], vec[VEC_BE2:VEC_BE2 + 1, :])

    # Single lane-dense output slab: full unmasked 128-lane store of the decoder
    # output (padded lanes are zero), then per-head probs into lanes 32:48.
    out_ref[...] = out
    for h in range(HEADS):
        out_ref[:, HIDDEN + h * S:HIDDEN + (h + 1) * S] = probs[h]


def pack_params(params):
    """One-time host-side prep: fold LoRA, fuse QKV, pre-transpose, pack ONE slab."""
    def fold(w, b_mat, a_mat):
        # y = x@W.T + (x@A.T)@B.T == x @ (W + B@A).T  (no alpha/rank scaling in ref)
        return w + b_mat @ a_mat

    wq = fold(params["wq"], params["bqm"], params["aq"])
    wk = fold(params["wk"], params["bkm"], params["ak"])
    wv = fold(params["wv"], params["bvm"], params["av"])

    # Pre-transpose every weight to [in_features, out_features].
    w_qkv_t = jnp.concatenate([wq, wk, wv], axis=0).T          # (32, 96)
    wo_t = params["wo"].T                                      # (32, 32)
    w1_t = params["w1"].T                                      # (32, 64)
    w2_t = params["w2"].T                                      # (64, 32)

    def pad_block(w, rows):
        r, c = w.shape
        return jnp.pad(w, ((0, rows - r), (0, LANE - c)))

    def pad_row(v):
        return jnp.pad(v, ((0, 0), (0, LANE - v.shape[1])))

    b_qkv = jnp.concatenate([params["bq"], params["bk"], params["bv"]], axis=1)
    vec_rows = jnp.concatenate([
        pad_row(b_qkv), pad_row(params["bo"]),
        pad_row(params["g1"]), pad_row(params["be1"]),
        pad_row(params["b1"]), pad_row(params["b2"]),
        pad_row(params["g2"]), pad_row(params["be2"]),
    ], axis=0)                                                  # (8, 128)

    # NOTE: on v6e / v7x this slab (and the in-kernel dot inputs) can be bfloat16
    # with preferred_element_type=f32 for fewer MXU passes; kept f32 for exact parity.
    w_slab = jnp.concatenate([
        pad_block(w_qkv_t, LANE),    # rows   0:128  (in-dim padded -> x feeds directly)
        pad_block(wo_t, ATT_OUT),    # rows 128:160  (read per head in 16-row blocks)
        pad_block(w1_t, LANE),       # rows 160:288
        pad_block(w2_t, LANE),       # rows 288:416
        vec_rows,                    # rows 416:424
    ], axis=0).astype(jnp.float32)   # (424, 128)
    return w_slab


@jax.jit
def lora_decoder_forward(x, mask, w_slab):
    B, S, H = x.shape
    xp = jnp.pad(x, ((0, 0), (0, 0), (0, LANE - H)))            # 128-lane dense input
    am = jnp.where(mask > 0, 0.0, -1e9).astype(jnp.float32)     # additive mask, once

    vmem = pltpu.MemorySpace.VMEM
    slab = pl.pallas_call(
        lora_decoder_kernel,
        out_shape=jax.ShapeDtypeStruct((B * S, LANE), jnp.float32),
        in_specs=[pl.BlockSpec(memory_space=vmem)] * 3,
        out_specs=pl.BlockSpec(memory_space=vmem),
    )(xp, am, w_slab)

    # Cheap XLA slices/reshapes outside the kernel restore the PyTorch layouts.
    out = slab[:, :H].reshape(B, S, H)
    scores = slab[:, H:H + HEADS * S].reshape(B, S, HEADS, S).transpose(0, 2, 1, 3)
    return out, scores


def lora_decoder_reference(x, mask, params):
    """Pure-JAX reference mirroring the PyTorch forward literally (unfused)."""
    def linear(v, w, b=None):
        y = v @ w.T
        return y if b is None else y + b

    q = linear(x, params["wq"], params["bq"]) + linear(linear(x, params["aq"]), params["bqm"])
    k = linear(x, params["wk"], params["bk"]) + linear(linear(x, params["ak"]), params["bkm"])
    v = linear(x, params["wv"], params["bv"]) + linear(linear(x, params["av"]), params["bvm"])

    B, S, H = x.shape

    def split(t):   # (B,S,H) -> (B,HEADS,S,D)
        return t.reshape(B, S, HEADS, HEAD_DIM).transpose(0, 2, 1, 3)

    qh, kh, vh = split(q), split(k), split(v)
    s = jnp.einsum('bhqd,bhkd->bhqk', qh, kh) * SCALE
    s = jnp.where(mask[:, None] > 0, s, -1e9)
    p = jax.nn.softmax(s, axis=-1)
    ctx = jnp.einsum('bhqk,bhkd->bhqd', p, vh).transpose(0, 2, 1, 3).reshape(B, S, H)

    def ln(t, g, b):
        mu = jnp.mean(t, -1, keepdims=True)
        var = jnp.mean((t - mu) ** 2, -1, keepdims=True)
        return (t - mu) * jax.lax.rsqrt(var + LN_EPS) * g + b

    att = linear(ctx, params["wo"], params["bo"])
    y = ln(att + x, params["g1"], params["be1"])
    h1 = jnp.maximum(linear(y, params["w1"], params["b1"]), 0.0)
    f = linear(h1, params["w2"], params["b2"])
    return ln(f + y, params["g2"], params["be2"]), p


def init_params(key):
    ks = jax.random.split(key, 20)
    f32 = jnp.float32

    def W(k, out_f, in_f, scale=0.05):
        return jax.random.normal(k, (out_f, in_f), f32) * scale

    def b(k, out_f, scale=0.01):
        return jax.random.normal(k, (1, out_f), f32) * scale

    p = {}
    p["wq"], p["bq"] = W(ks[0], ATT_OUT, HIDDEN), b(ks[1], ATT_OUT)
    p["wk"], p["bk"] = W(ks[2], ATT_OUT, HIDDEN), b(ks[3], ATT_OUT)
    p["wv"], p["bv"] = W(ks[4], ATT_OUT, HIDDEN), b(ks[5], ATT_OUT)
    # LoRA adapters.  The PyTorch module zero-inits the A matrices (nn.init.zeros_);
    # we use small NONZERO values so the folded LoRA path is actually exercised by
    # the numerical check (it would be a no-op with zeros).
    p["aq"] = W(ks[15], RANK, HIDDEN)
    p["ak"] = W(ks[16], RANK, HIDDEN)
    p["av"] = W(ks[17], RANK, HIDDEN)
    p["bqm"] = W(ks[6], ATT_OUT, RANK)
    p["bkm"] = W(ks[7], ATT_OUT, RANK)
    p["bvm"] = W(ks[8], ATT_OUT, RANK)
    p["wo"], p["bo"] = W(ks[9], HIDDEN, ATT_OUT), b(ks[10], HIDDEN)
    p["g1"] = jnp.ones((1, HIDDEN), f32)
    p["be1"] = jnp.zeros((1, HIDDEN), f32)
    p["w1"], p["b1"] = W(ks[11], FFN_DIM, HIDDEN), b(ks[12], FFN_DIM)
    p["w2"], p["b2"] = W(ks[13], HIDDEN, FFN_DIM), b(ks[14], HIDDEN)
    p["g2"] = jnp.ones((1, HIDDEN), f32)
    p["be2"] = jnp.zeros((1, HIDDEN), f32)
    return p


if __name__ == "__main__":
    key = jax.random.PRNGKey(0)
    kx, kp = jax.random.split(key, 2)
    x = jax.random.normal(kx, (BATCH, SEQ, HIDDEN), jnp.float32)
    # causal attention mask (1 = attend), broadcast over batch
    mask = jnp.broadcast_to(jnp.tril(jnp.ones((SEQ, SEQ), jnp.float32)),
                            (BATCH, SEQ, SEQ))
    params = init_params(kp)

    # One-time weight packing (LoRA fold + fuse + pad), hoisted out of the jitted call.
    w_slab = jax.block_until_ready(pack_params(params))

    out, scores = lora_decoder_forward(x, mask, w_slab)
    jax.block_until_ready((out, scores))
    assert out.shape == (BATCH, SEQ, HIDDEN)
    assert scores.shape == (BATCH, HEADS, SEQ, SEQ)

    # Numerical check against a literal (unfused) reference of the PyTorch forward.
    with jax.default_matmul_precision("float32"):
        ref_out, ref_scores = lora_decoder_reference(x, mask, params)
    assert jnp.allclose(out, ref_out, atol=2e-3, rtol=2e-3), \
        float(jnp.max(jnp.abs(out - ref_out)))
    assert jnp.allclose(scores, ref_scores, atol=2e-3, rtol=2e-3), \
        float(jnp.max(jnp.abs(scores - ref_scores)))

    print("KERNEL_OK")
</pallas_src>

<mosaic_0001>
module attributes {stable_mosaic.version = 11 : i64} {
  func.func @lora_decoder_kernel(%arg0: memref<2x8x128xf32, #tpu.memory_space<vmem>>, %arg1: memref<2x8x8xf32, #tpu.memory_space<vmem>>, %arg2: memref<424x128xf32, #tpu.memory_space<vmem>>, %arg3: memref<16x128xf32, #tpu.memory_space<vmem>>) attributes {dimension_semantics = [], scalar_prefetch = 0 : i64, scratch_operands = 0 : i64, tpu.core_type = #tpu.core_type<tc>} {
    %c0 = arith.constant 0 : index
    %c0_0 = arith.constant 0 : index
    %c0_1 = arith.constant 0 : index
    %0 = vector.load %arg0[%c0, %c0_0, %c0_1] : memref<2x8x128xf32, #tpu.memory_space<vmem>>, vector<2x8x128xf32>
    %1 = vector.shape_cast %0 : vector<2x8x128xf32> to vector<16x128xf32>
    %c416 = arith.constant 416 : index
    %c0_2 = arith.constant 0 : index
    %2 = vector.load %arg2[%c416, %c0_2] : memref<424x128xf32, #tpu.memory_space<vmem>>, vector<8x128xf32>
    %c0_3 = arith.constant 0 : index
    %c0_4 = arith.constant 0 : index
    %3 = vector.load %arg2[%c0_3, %c0_4] : memref<424x128xf32, #tpu.memory_space<vmem>>, vector<128x128xf32>
    %cst = arith.constant dense<0.000000e+00> : vector<16x128xf32>
    %4 = tpu.matmul %1, %3, %cst {dimension_numbers = #tpu.dot_dimension_numbers<[1], [0], [0], [1], [0, 0, 1, 1], [], []>} : vector<16x128xf32>, vector<128x128xf32>, vector<16x128xf32> -> vector<16x128xf32>
    %5 = vector.extract_strided_slice %2 {offsets = [0, 0], sizes = [1, 128], strides = [1, 1]} : vector<8x128xf32> to vector<1x128xf32>
    %6 = vector.broadcast %5 : vector<1x128xf32> to vector<16x128xf32>
    %7 = arith.addf %4, %6 : vector<16x128xf32>
    %8 = vector.shape_cast %7 : vector<16x128xf32> to vector<2x8x128xf32>
    %c0_5 = arith.constant 0 : index
    %c0_6 = arith.constant 0 : index
    %c0_7 = arith.constant 0 : index
    %9 = vector.load %arg1[%c0_5, %c0_6, %c0_7] : memref<2x8x8xf32, #tpu.memory_space<vmem>>, vector<2x8x8xf32>
    %10 = vector.extract_strided_slice %2 {offsets = [1, 0], sizes = [1, 128], strides = [1, 1]} : vector<8x128xf32> to vector<1x128xf32>
    %11 = vector.shape_cast %10 : vector<1x128xf32> to vector<1x128xf32>
    %12 = vector.broadcast %11 : vector<1x128xf32> to vector<16x128xf32>
    %13 = vector.extract_strided_slice %8 {offsets = [0, 0, 0], sizes = [2, 8, 16], strides = [1, 1, 1]} : vector<2x8x128xf32> to vector<2x8x16xf32>
    %14 = vector.extract_strided_slice %8 {offsets = [0, 0, 32], sizes = [2, 8, 16], strides = [1, 1, 1]} : vector<2x8x128xf32> to vector<2x8x16xf32>
    %15 = vector.extract_strided_slice %8 {offsets = [0, 0, 64], sizes = [2, 8, 16], strides = [1, 1, 1]} : vector<2x8x128xf32> to vector<2x8x16xf32>
    "tpu.trace_start"() <{level = 10 : i32, message = "bqd,bkd->bqk"}> : () -> ()
    %cst_8 = arith.constant dense<0.000000e+00> : vector<2x8x8xf32>
    %16 = tpu.matmul %13, %14, %cst_8 {dimension_numbers = #tpu.dot_dimension_numbers<[2], [2], [1], [1], [0, 0, 0, 1, 1, 1], [0], [0]>} : vector<2x8x16xf32>, vector<2x8x16xf32>, vector<2x8x8xf32> -> vector<2x8x8xf32>
    "tpu.trace_stop"() : () -> ()
    %cst_9 = arith.constant 2.500000e-01 : f32
    %17 = vector.broadcast %cst_9 : f32 to vector<2x8x8xf32>
    %18 = arith.mulf %16, %17 : vector<2x8x8xf32>
    %19 = arith.addf %18, %9 : vector<2x8x8xf32>
    %cst_10 = arith.constant dense<0xFF800000> : vector<2x8xf32>
    %20 = vector.multi_reduction <maximumf>, %19, %cst_10 [2] : vector<2x8x8xf32> to vector<2x8xf32>
    %21 = vector.shape_cast %20 : vector<2x8xf32> to vector<2x8x1xf32>
    %22 = vector.broadcast %21 : vector<2x8x1xf32> to vector<2x8x8xf32>
    %23 = arith.subf %19, %22 : vector<2x8x8xf32>
    %24 = math.exp %23 : vector<2x8x8xf32>
    %cst_11 = arith.constant dense<0.000000e+00> : vector<2x8xf32>
    %25 = vector.multi_reduction <add>, %24, %cst_11 [2] : vector<2x8x8xf32> to vector<2x8xf32>
    %26 = vector.shape_cast %25 : vector<2x8xf32> to vector<2x8x1xf32>
    %27 = tpu.reciprocal %26 {approx = true} : vector<2x8x1xf32> -> vector<2x8x1xf32>
    %28 = vector.broadcast %27 : vector<2x8x1xf32> to vector<2x8x8xf32>
    %29 = arith.mulf %24, %28 : vector<2x8x8xf32>
    %30 = vector.shape_cast %29 : vector<2x8x8xf32> to vector<16x8xf32>
    "tpu.trace_start"() <{level = 10 : i32, message = "bqk,bkd->bqd"}> : () -> ()
    %cst_12 = arith.constant dense<0.000000e+00> : vector<2x8x16xf32>
    %31 = tpu.matmul %29, %15, %cst_12 {dimension_numbers = #tpu.dot_dimension_numbers<[2], [1], [1], [2], [0, 0, 0, 1, 1, 2], [0], [0]>} : vector<2x8x8xf32>, vector<2x8x16xf32>, vector<2x8x16xf32> -> vector<2x8x16xf32>
    "tpu.trace_stop"() : () -> ()
    %32 = vector.shape_cast %31 : vector<2x8x16xf32> to vector<16x16xf32>
    %c128 = arith.constant 128 : index
    %c0_13 = arith.constant 0 : index
    %33 = vector.load %arg2[%c128, %c0_13] : memref<424x128xf32, #tpu.memory_space<vmem>>, vector<16x128xf32>
    %cst_14 = arith.constant dense<0.000000e+00> : vector<16x128xf32>
    %34 = tpu.matmul %32, %33, %cst_14 {dimension_numbers = #tpu.dot_dimension_numbers<[1], [0], [0], [1], [0, 0, 1, 1], [], []>} : vector<16x16xf32>, vector<16x128xf32>, vector<16x128xf32> -> vector<16x128xf32>
    %35 = arith.addf %12, %34 : vector<16x128xf32>
    %36 = vector.extract_strided_slice %8 {offsets = [0, 0, 16], sizes = [2, 8, 16], strides = [1, 1, 1]} : vector<2x8x128xf32> to vector<2x8x16xf32>
    %37 = vector.extract_strided_slice %8 {offsets = [0, 0, 48], sizes = [2, 8, 16], strides = [1, 1, 1]} : vector<2x8x128xf32> to vector<2x8x16xf32>
    %38 = vector.extract_strided_slice %8 {offsets = [0, 0, 80], sizes = [2, 8, 16], strides = [1, 1, 1]} : vector<2x8x128xf32> to vector<2x8x16xf32>
    "tpu.trace_start"() <{level = 10 : i32, message = "bqd,bkd->bqk"}> : () -> ()
    %cst_15 = arith.constant dense<0.000000e+00> : vector<2x8x8xf32>
    %39 = tpu.matmul %36, %37, %cst_15 {dimension_numbers = #tpu.dot_dimension_numbers<[2], [2], [1], [1], [0, 0, 0, 1, 1, 1], [0], [0]>} : vector<2x8x16xf32>, vector<2x8x16xf32>, vector<2x8x8xf32> -> vector<2x8x8xf32>
    "tpu.trace_stop"() : () -> ()
    %cst_16 = arith.constant 2.500000e-01 : f32
    %40 = vector.broadcast %cst_16 : f32 to vector<2x8x8xf32>
    %41 = arith.mulf %39, %40 : vector<2x8x8xf32>
    %42 = arith.addf %41, %9 : vector<2x8x8xf32>
    %cst_17 = arith.constant dense<0xFF800000> : vector<2x8xf32>
    %43 = vector.multi_reduction <maximumf>, %42, %cst_17 [2] : vector<2x8x8xf32> to vector<2x8xf32>
    %44 = vector.shape_cast %43 : vector<2x8xf32> to vector<2x8x1xf32>
    %45 = vector.broadcast %44 : vector<2x8x1xf32> to vector<2x8x8xf32>
    %46 = arith.subf %42, %45 : vector<2x8x8xf32>
    %47 = math.exp %46 : vector<2x8x8xf32>
    %cst_18 = arith.constant dense<0.000000e+00> : vector<2x8xf32>
    %48 = vector.multi_reduction <add>, %47, %cst_18 [2] : vector<2x8x8xf32> to vector<2x8xf32>
    %49 = vector.shape_cast %48 : vector<2x8xf32> to vector<2x8x1xf32>
    %50 = tpu.reciprocal %49 {approx = true} : vector<2x8x1xf32> -> vector<2x8x1xf32>
    %51 = vector.broadcast %50 : vector<2x8x1xf32> to vector<2x8x8xf32>
    %52 = arith.mulf %47, %51 : vector<2x8x8xf32>
    %53 = vector.shape_cast %52 : vector<2x8x8xf32> to vector<16x8xf32>
    "tpu.trace_start"() <{level = 10 : i32, message = "bqk,bkd->bqd"}> : () -> ()
    %cst_19 = arith.constant dense<0.000000e+00> : vector<2x8x16xf32>
    %54 = tpu.matmul %52, %38, %cst_19 {dimension_numbers = #tpu.dot_dimension_numbers<[2], [1], [1], [2], [0, 0, 0, 1, 1, 2], [0], [0]>} : vector<2x8x8xf32>, vector<2x8x16xf32>, vector<2x8x16xf32> -> vector<2x8x16xf32>
    "tpu.trace_stop"() : () -> ()
    %55 = vector.shape_cast %54 : vector<2x8x16xf32> to vector<16x16xf32>
    %c144 = arith.constant 144 : index
    %c0_20 = arith.constant 0 : index
    %56 = vector.load %arg2[%c144, %c0_20] : memref<424x128xf32, #tpu.memory_space<vmem>>, vector<16x128xf32>
    %cst_21 = arith.constant dense<0.000000e+00> : vector<16x128xf32>
    %57 = tpu.matmul %55, %56, %cst_21 {dimension_numbers = #tpu.dot_dimension_numbers<[1], [0], [0], [1], [0, 0, 1, 1], [], []>} : vector<16x16xf32>, vector<16x128xf32>, vector<16x128xf32> -> vector<16x128xf32>
    %58 = arith.addf %35, %57 : vector<16x128xf32>
    %59 = arith.addf %58, %1 : vector<16x128xf32>
    %60 = vector.extract_strided_slice %2 {offsets = [2, 0], sizes = [1, 128], strides = [1, 1]} : vector<8x128xf32> to vector<1x128xf32>
    %61 = vector.extract_strided_slice %2 {offsets = [3, 0], sizes = [1, 128], strides = [1, 1]} : vector<8x128xf32> to vector<1x128xf32>
    %cst_22 = arith.constant dense<0.000000e+00> : vector<16xf32>
    %62 = vector.multi_reduction <add>, %59, %cst_22 [1] : vector<16x128xf32> to vector<16xf32>
    %63 = vector.shape_cast %62 : vector<16xf32> to vector<16x1xf32>
    %cst_23 = arith.constant 3.125000e-02 : f32
    %64 = vector.broadcast %cst_23 : f32 to vector<16x1xf32>
    %65 = arith.mulf %63, %64 : vector<16x1xf32>
    %66 = arith.mulf %59, %59 : vector<16x128xf32>
    %cst_24 = arith.constant dense<0.000000e+00> : vector<16xf32>
    %67 = vector.multi_reduction <add>, %66, %cst_24 [1] : vector<16x128xf32> to vector<16xf32>
    %68 = vector.shape_cast %67 : vector<16xf32> to vector<16x1xf32>
    %cst_25 = arith.constant 3.125000e-02 : f32
    %69 = vector.broadcast %cst_25 : f32 to vector<16x1xf32>
    %70 = arith.mulf %68, %69 : vector<16x1xf32>
    %71 = arith.mulf %65, %65 : vector<16x1xf32>
    %72 = arith.subf %70, %71 : vector<16x1xf32>
    %73 = vector.broadcast %65 : vector<16x1xf32> to vector<16x128xf32>
    %74 = arith.subf %59, %73 : vector<16x128xf32>
    %cst_26 = arith.constant 9.99999974E-6 : f32
    %75 = vector.broadcast %cst_26 : f32 to vector<16x1xf32>
    %76 = arith.addf %72, %75 : vector<16x1xf32>
    %77 = math.rsqrt %76 : vector<16x1xf32>
    %78 = vector.broadcast %77 : vector<16x1xf32> to vector<16x128xf32>
    %79 = arith.mulf %74, %78 : vector<16x128xf32>
    %80 = vector.broadcast %60 : vector<1x128xf32> to vector<16x128xf32>
    %81 = arith.mulf %79, %80 : vector<16x128xf32>
    %82 = vector.broadcast %61 : vector<1x128xf32> to vector<16x128xf32>
    %83 = arith.addf %81, %82 : vector<16x128xf32>
    %c160 = arith.constant 160 : index
    %c0_27 = arith.constant 0 : index
    %84 = vector.load %arg2[%c160, %c0_27] : memref<424x128xf32, #tpu.memory_space<vmem>>, vector<128x128xf32>
    %cst_28 = arith.constant dense<0.000000e+00> : vector<16x128xf32>
    %85 = tpu.matmul %83, %84, %cst_28 {dimension_numbers = #tpu.dot_dimension_numbers<[1], [0], [0], [1], [0, 0, 1, 1], [], []>} : vector<16x128xf32>, vector<128x128xf32>, vector<16x128xf32> -> vector<16x128xf32>
    %86 = vector.extract_strided_slice %2 {offsets = [4, 0], sizes = [1, 128], strides = [1, 1]} : vector<8x128xf32> to vector<1x128xf32>
    %87 = vector.broadcast %86 : vector<1x128xf32> to vector<16x128xf32>
    %88 = arith.addf %85, %87 : vector<16x128xf32>
    %cst_29 = arith.constant 0.000000e+00 : f32
    %89 = vector.broadcast %cst_29 : f32 to vector<16x128xf32>
    %90 = arith.maximumf %88, %89 : vector<16x128xf32>
    %c288 = arith.constant 288 : index
    %c0_30 = arith.constant 0 : index
    %91 = vector.load %arg2[%c288, %c0_30] : memref<424x128xf32, #tpu.memory_space<vmem>>, vector<128x128xf32>
    %cst_31 = arith.constant dense<0.000000e+00> : vector<16x128xf32>
    %92 = tpu.matmul %90, %91, %cst_31 {dimension_numbers = #tpu.dot_dimension_numbers<[1], [0], [0], [1], [0, 0, 1, 1], [], []>} : vector<16x128xf32>, vector<128x128xf32>, vector<16x128xf32> -> vector<16x128xf32>
    %93 = vector.extract_strided_slice %2 {offsets = [5, 0], sizes = [1, 128], strides = [1, 1]} : vector<8x128xf32> to vector<1x128xf32>
    %94 = vector.broadcast %93 : vector<1x128xf32> to vector<16x128xf32>
    %95 = arith.addf %92, %94 : vector<16x128xf32>
    %96 = arith.addf %95, %83 : vector<16x128xf32>
    %97 = vector.extract_strided_slice %2 {offsets = [6, 0], sizes = [1, 128], strides = [1, 1]} : vector<8x128xf32> to vector<1x128xf32>
    %98 = vector.extract_strided_slice %2 {offsets = [7, 0], sizes = [1, 128], strides = [1, 1]} : vector<8x128xf32> to vector<1x128xf32>
    %cst_32 = arith.constant dense<0.000000e+00> : vector<16xf32>
    %99 = vector.multi_reduction <add>, %96, %cst_32 [1] : vector<16x128xf32> to vector<16xf32>
    %100 = vector.shape_cast %99 : vector<16xf32> to vector<16x1xf32>
    %cst_33 = arith.constant 3.125000e-02 : f32
    %101 = vector.broadcast %cst_33 : f32 to vector<16x1xf32>
    %102 = arith.mulf %100, %101 : vector<16x1xf32>
    %103 = arith.mulf %96, %96 : vector<16x128xf32>
    %cst_34 = arith.constant dense<0.000000e+00> : vector<16xf32>
    %104 = vector.multi_reduction <add>, %103, %cst_34 [1] : vector<16x128xf32> to vector<16xf32>
    %105 = vector.shape_cast %104 : vector<16xf32> to vector<16x1xf32>
    %cst_35 = arith.constant 3.125000e-02 : f32
    %106 = vector.broadcast %cst_35 : f32 to vector<16x1xf32>
    %107 = arith.mulf %105, %106 : vector<16x1xf32>
    %108 = arith.mulf %102, %102 : vector<16x1xf32>
    %109 = arith.subf %107, %108 : vector<16x1xf32>
    %110 = vector.broadcast %102 : vector<16x1xf32> to vector<16x128xf32>
    %111 = arith.subf %96, %110 : vector<16x128xf32>
    %cst_36 = arith.constant 9.99999974E-6 : f32
    %112 = vector.broadcast %cst_36 : f32 to vector<16x1xf32>
    %113 = arith.addf %109, %112 : vector<16x1xf32>
    %114 = math.rsqrt %113 : vector<16x1xf32>
    %115 = vector.broadcast %114 : vector<16x1xf32> to vector<16x128xf32>
    %116 = arith.mulf %111, %115 : vector<16x128xf32>
    %117 = vector.broadcast %97 : vector<1x128xf32> to vector<16x128xf32>
    %118 = arith.mulf %116, %117 : vector<16x128xf32>
    %119 = vector.broadcast %98 : vector<1x128xf32> to vector<16x128xf32>
    %120 = arith.addf %118, %119 : vector<16x128xf32>
    %c0_37 = arith.constant 0 : index
    %c0_38 = arith.constant 0 : index
    %121 = vector.load %arg3[%c0_37, %c0_38] : memref<16x128xf32, #tpu.memory_space<vmem>>, vector<16x128xf32>
    tpu.vector_store %arg3[%c0_37, %c0_38], %120 {strides = array<i32>} : memref<16x128xf32, #tpu.memory_space<vmem>>, vector<16x128xf32>,
    %c0_39 = arith.constant 0 : index
    %c32 = arith.constant 32 : index
    %122 = vector.load %arg3[%c0_39, %c32] : memref<16x128xf32, #tpu.memory_space<vmem>>, vector<16x8xf32>
    tpu.vector_store %arg3[%c0_39, %c32], %30 {strides = array<i32>} : memref<16x128xf32, #tpu.memory_space<vmem>>, vector<16x8xf32>,
    %c0_40 = arith.constant 0 : index
    %c40 = arith.constant 40 : index
    %123 = vector.load %arg3[%c0_40, %c40] : memref<16x128xf32, #tpu.memory_space<vmem>>, vector<16x8xf32>
    tpu.vector_store %arg3[%c0_40, %c40], %53 {strides = array<i32>} : memref<16x128xf32, #tpu.memory_space<vmem>>, vector<16x8xf32>,
    return
  }
}

</mosaic_0001>

<llo_original>
// kernel: lora_decoder_forward.1
$region0: #{lora_decoder_forward.1}
  #allocation0 [shape = 'u32[]', space=smem, size = 0x4, offset = 0x4, fixed_abs, tag = 'smem constant byte address 0x4 - core index']
  #allocation1 [shape = 'u32[144,128]{1,0:T(1,128)}', space=vmem, size = 0x12000, scoped, tag = 'internal scratch']
  %s0 = inlined_call_operand.vmem [shape: f32[2,8,128], index: 0, kind: input, shape index: {}]
  %s1 = inlined_call_operand.vmem [shape: f32[2,8,8], index: 1, kind: input, shape index: {}]
  %s2 = inlined_call_operand.hbm [shape: f32[424,128], index: 2, kind: input, shape index: {}]
  %s3 = inlined_call_operand.vmem [shape: f32[16,128], index: 3, kind: output, shape index: {}]
  %s4 = sld [smem:[#allocation0]]
  $region26: #{lora_decoder_forward.1} parent=0
    _
  %s6 = ssub.s32 1, %s4
  %s7 = scalar_select 0, %s6, %s4
  $region1: #{lora_decoder_forward.1} parent=0
    #allocation2 [shape = 'u8[217088]{0}', space=vmem, size = 0x35000, scoped, tag = 'input window, operand 2, single buffered']
    #allocation3 [shape = 's32[1]{0}', space=sflag, size = 0x4, scoped, tag = 'scoped memory for lora_decoder_forward.1']
    %8 = vsyncpa [#allocation3], 0
    // Predicated region
    $region2: #{lora_decoder_forward.1} parent=1 // pred_check
      _
    $region3: #{lora_decoder_forward.1} parent=1 // pred_check_branch
      %10 = sbr.rel (0) target = $region5
    $region4: #{lora_decoder_forward.1} parent=1 // pred_region
      _
    $region5: #{lora_decoder_forward.1} parent=1 // pred_fallthru
      _
    // Predicated region
    $region6: #{lora_decoder_forward.1} parent=1 // pred_check
      _
    $region7: #{lora_decoder_forward.1} parent=1 // pred_check_branch
      %12 = sbr.rel (0) target = $region9
    $region8: #{lora_decoder_forward.1} parent=1 // pred_region
      _
    $region9: #{lora_decoder_forward.1} parent=1 // pred_fallthru
      _
    // Predicated region
    $region10: #{lora_decoder_forward.1} parent=1 // pred_check
      _
    $region11: #{lora_decoder_forward.1} parent=1 // pred_check_branch
      %14 = sbr.rel (0) target = $region13
    $region12: #{lora_decoder_forward.1} parent=1 // pred_region
      %s16 = ssub.s32 6784, 6784
      %17 = vsyncadd [#allocation3], %s16
      %s18 = sshll.u32 [#allocation2], 4
      %s19 = int_to_ptr.vmem [resolvable:$true] %s18
      %24 = dma.hbm_to_vmem [thread:$0]  %s2, 6784, %s19, [#allocation3], 128, 128, 8
    $region13: #{lora_decoder_forward.1} parent=1 // pred_fallthru
      _
    // Predicated region
    $region14: #{lora_decoder_forward.1} parent=1 // pred_check
      _
    $region15: #{lora_decoder_forward.1} parent=1 // pred_check_branch
      %26 = sbr.rel (0) target = $region17
    $region16: #{lora_decoder_forward.1} parent=1 // pred_region
      %27 = dma.done [#allocation3], 6784
    $region17: #{lora_decoder_forward.1} parent=1 // pred_fallthru
      _
    %v28 = vld [vmem:[%s0] sm:$0xff]
    %v29 = vld [vmem:[%s0 + $0x8] sm:$0xff]
    %v30 = vld [vmem:[#allocation2 + $0x1a0] sm:$0xff]
    %v31 = vld [vmem:[#allocation2] sm:$0xff]
    %v32 = vld [vmem:[#allocation2 + $0x8] sm:$0xff]
    %v33 = vld [vmem:[#allocation2 + $0x10] sm:$0xff]
    %v34 = vld [vmem:[#allocation2 + $0x18] sm:$0xff]
    %v35 = vld [vmem:[#allocation2 + $0x20] sm:$0xff]
    %v36 = vld [vmem:[#allocation2 + $0x28] sm:$0xff]
    %v37 = vld [vmem:[#allocation2 + $0x30] sm:$0xff]
    %v38 = vld [vmem:[#allocation2 + $0x38] sm:$0xff]
    %v39 = vld [vmem:[#allocation2 + $0x40] sm:$0xff]
    %v40 = vld [vmem:[#allocation2 + $0x48] sm:$0xff]
    %v41 = vld [vmem:[#allocation2 + $0x50] sm:$0xff]
    %v42 = vld [vmem:[#allocation2 + $0x58] sm:$0xff]
    %v43 = vld [vmem:[#allocation2 + $0x60] sm:$0xff]
    %v44 = vld [vmem:[#allocation2 + $0x68] sm:$0xff]
    %v45 = vld [vmem:[#allocation2 + $0x70] sm:$0xff]
    %v46 = vld [vmem:[#allocation2 + $0x78] sm:$0xff]
    %v47 = vlaneseq
    %v48 = vshrl.u32 %v47, 7
    %v49 = vsub.s32 0, %v48
    %v50 = vrot.slane %v30, %v49
    %51 = vmatprep.subr.mxu0 0.0
    %52 = vmatpush1.msra.mxu0 %v31
    %53 = vmatprep.subr.mxu0 0.0
    %54 = vmatpush1.msra.mxu0 %v32
    %55 = vmatprep.subr.mxu0 0.0
    %56 = vmatpush1.msra.mxu0 %v33
    %57 = vmatprep.subr.mxu0 0.0
    %58 = vmatpush1.msra.mxu0 %v34
    %59 = vmatprep.subr.mxu0 0.0
    %60 = vmatpush1.msra.mxu0 %v35
    %61 = vmatprep.subr.mxu0 0.0
    %62 = vmatpush1.msra.mxu0 %v36
    %63 = vmatprep.subr.mxu0 0.0
    %64 = vmatpush1.msra.mxu0 %v37
    %65 = vmatprep.subr.mxu0 0.0
    %66 = vmatpush1.msra.mxu0 %v38
    %67 = vmatprep.subr.mxu0 0.0
    %68 = vmatpush1.msra.mxu0 %v39
    %69 = vmatprep.subr.mxu0 0.0
    %70 = vmatpush1.msra.mxu0 %v40
    %71 = vmatprep.subr.mxu0 0.0
    %72 = vmatpush1.msra.mxu0 %v41
    %73 = vmatprep.subr.mxu0 0.0
    %74 = vmatpush1.msra.mxu0 %v42
    %75 = vmatprep.subr.mxu0 0.0
    %76 = vmatpush1.msra.mxu0 %v43
    %77 = vmatprep.subr.mxu0 0.0
    %78 = vmatpush1.msra.mxu0 %v44
    %79 = vmatprep.subr.mxu0 0.0
    %80 = vmatpush1.msra.mxu0 %v45
    %81 = vmatprep.subr.mxu0 0.0
    %82 = vmatpush1.msra.mxu0 %v46
    %83 = vmatprep.subr.mxu0 0.0
    %84 = vmatpush1.msra.mxu0 0.0
    %85 = vmatprep.subr.mxu0 0.0
    %86 = vmatpush1.msra.mxu0 0.0
    %87 = vmatprep.subr.mxu0 0.0
    %88 = vmatpush1.msra.mxu0 0.0
    %89 = vmatprep.subr.mxu0 0.0
    %90 = vmatpush1.msra.mxu0 0.0
    %91 = vmatprep.subr.mxu0 0.0
    %92 = vmatpush1.msra.mxu0 0.0
    %93 = vmatprep.subr.mxu0 0.0
    %94 = vmatpush1.msra.mxu0 0.0
    %95 = vmatprep.subr.mxu0 0.0
    %96 = vmatpush1.msra.mxu0 0.0
    %97 = vmatprep.subr.mxu0 0.0
    %98 = vmatpush1.msra.mxu0 0.0
    %99 = vmatprep.subr.mxu0 0.0
    %100 = vmatpush1.msra.mxu0 0.0
    %101 = vmatprep.subr.mxu0 0.0
    %102 = vmatpush1.msra.mxu0 0.0
    %103 = vmatprep.subr.mxu0 0.0
    %104 = vmatpush1.msra.mxu0 0.0
    %105 = vmatprep.subr.mxu0 0.0
    %106 = vmatpush1.msra.mxu0 0.0
    %107 = vmatprep.subr.mxu0 0.0
    %108 = vmatpush1.msra.mxu0 0.0
    %109 = vmatprep.subr.mxu0 0.0
    %110 = vmatpush1.msra.mxu0 0.0
    %111 = vmatprep.subr.mxu0 0.0
    %112 = vmatpush1.msra.mxu0 0.0
    %113 = vmatprep.subr.mxu0 0.0
    %114 = vmatpush1.msra.mxu0 0.0
    %115 = vmatprep.mubr.f32.mxu0 0.0
    %116 = vmatmul.mubr.f32.gmra.mrb[0].mxu0 %v28
    %v117 = vpop.f32.mrb[0].mxu0
    %v118 = vadd.f32 %v50, %v117
    %v119 = vpop.f32.mrb[0].mxu0
    %120 = vmatprep.mubr.f32.mxu0 0.0
    %121 = vmatmul.mubr.f32.gmra.mrb[0].mxu0 %v29
    %v122 = vpop.f32.mrb[0].mxu0
    %v123 = vadd.f32 %v50, %v122
    %v124 = vpop.f32.mrb[0].mxu0
    %125 = vdwg.mxu0
    %v126 = vld [vmem:[%s1] sm:$0xff]
    %v127 = vld [vmem:[%s1 + $0x8] sm:$0xff]
    %v128 = vlaneseq
    %v129 = vshrl.u32 %v128, 7
    %v130 = vsub.s32 1, %v129
    %v131 = vrot.slane %v30, %v130
    %133 = vrot.lane.b32.xlu0 %v118, 96
    %v134 = vpop.permute.xlu0 %133
    %vm135 = vcmask 130048
    %v136 = vsel %vm135, %v118, 0
    %v138 = vsel %vm135, %v134, 0
    %140 = vmatprep.subr.mxu0 0.0
    %141 = vmatpush1.xpose.msra.mxu0 %v138
    %142 = vmatprep.subr.mxu0 0.0
    %143 = vmatpush1.xpose.msra.mxu0 0.0
    %144 = vmatprep.subr.mxu0 0.0
    %145 = vmatpush1.xpose.msra.mxu0 0.0
    %146 = vmatprep.subr.mxu0 0.0
    %147 = vmatpush1.xpose.msra.mxu0 0.0
    %148 = vmatprep.subr.mxu0 0.0
    %149 = vmatpush1.xpose.msra.mxu0 0.0
    %150 = vmatprep.subr.mxu0 0.0
    %151 = vmatpush1.xpose.msra.mxu0 0.0
    %152 = vmatprep.subr.mxu0 0.0
    %153 = vmatpush1.xpose.msra.mxu0 0.0
    %154 = vmatprep.subr.mxu0 0.0
    %155 = vmatpush1.xpose.msra.mxu0 0.0
    %156 = vmatprep.subr.mxu0 0.0
    %157 = vmatpush1.xpose.msra.mxu0 0.0
    %158 = vmatprep.subr.mxu0 0.0
    %159 = vmatpush1.xpose.msra.mxu0 0.0
    %160 = vmatprep.subr.mxu0 0.0
    %161 = vmatpush1.xpose.msra.mxu0 0.0
    %162 = vmatprep.subr.mxu0 0.0
    %163 = vmatpush1.xpose.msra.mxu0 0.0
    %164 = vmatprep.subr.mxu0 0.0
    %165 = vmatpush1.xpose.msra.mxu0 0.0
    %166 = vmatprep.subr.mxu0 0.0
    %167 = vmatpush1.xpose.msra.mxu0 0.0
    %168 = vmatprep.subr.mxu0 0.0
    %169 = vmatpush1.xpose.msra.mxu0 0.0
    %170 = vmatprep.subr.mxu0 0.0
    %171 = vmatpush1.xpose.msra.mxu0 0.0
    %172 = vmatprep.subr.mxu0 0.0
    %173 = vmatpush1.xpose.msra.mxu0 0.0
    %174 = vmatprep.subr.mxu0 0.0
    %175 = vmatpush1.xpose.msra.mxu0 0.0
    %176 = vmatprep.subr.mxu0 0.0
    %177 = vmatpush1.xpose.msra.mxu0 0.0
    %178 = vmatprep.subr.mxu0 0.0
    %179 = vmatpush1.xpose.msra.mxu0 0.0
    %180 = vmatprep.subr.mxu0 0.0
    %181 = vmatpush1.xpose.msra.mxu0 0.0
    %182 = vmatprep.subr.mxu0 0.0
    %183 = vmatpush1.xpose.msra.mxu0 0.0
    %184 = vmatprep.subr.mxu0 0.0
    %185 = vmatpush1.xpose.msra.mxu0 0.0
    %186 = vmatprep.subr.mxu0 0.0
    %187 = vmatpush1.xpose.msra.mxu0 0.0
    %188 = vmatprep.subr.mxu0 0.0
    %189 = vmatpush1.xpose.msra.mxu0 0.0
    %190 = vmatprep.subr.mxu0 0.0
    %191 = vmatpush1.xpose.msra.mxu0 0.0
    %192 = vmatprep.subr.mxu0 0.0
    %193 = vmatpush1.xpose.msra.mxu0 0.0
    %194 = vmatprep.subr.mxu0 0.0
    %195 = vmatpush1.xpose.msra.mxu0 0.0
    %196 = vmatprep.subr.mxu0 0.0
    %197 = vmatpush1.xpose.msra.mxu0 0.0
    %198 = vmatprep.subr.mxu0 0.0
    %199 = vmatpush1.xpose.msra.mxu0 0.0
    %200 = vmatprep.subr.mxu0 0.0
    %201 = vmatpush1.xpose.msra.mxu0 0.0
    %202 = vmatprep.subr.mxu0 0.0
    %203 = vmatpush1.xpose.msra.mxu0 0.0
    %204 = vmatprep.mubr.f32.mxu0 0.0
    %205 = vmatmul.mubr.f32.gmra.mrb[0].mxu0 %v136
    %v206 = vpop.f32.mrb[0].mxu0
    %v207 = vadd.f32 0.0, %v206
    %v208 = vpop.f32.mrb[0].mxu0
    %209 = vdwg.mxu0
    %211 = vrot.lane.b32.xlu0 %v123, 96
    %v212 = vpop.permute.xlu0 %211
    %v213 = vsel %vm135, %v123, 0
    %v215 = vsel %vm135, %v212, 0
    %217 = vmatprep.subr.mxu0 0.0
    %218 = vmatpush1.xpose.msra.mxu0 %v215
    %219 = vmatprep.subr.mxu0 0.0
    %220 = vmatpush1.xpose.msra.mxu0 0.0
    %221 = vmatprep.subr.mxu0 0.0
    %222 = vmatpush1.xpose.msra.mxu0 0.0
    %223 = vmatprep.subr.mxu0 0.0
    %224 = vmatpush1.xpose.msra.mxu0 0.0
    %225 = vmatprep.subr.mxu0 0.0
    %226 = vmatpush1.xpose.msra.mxu0 0.0
    %227 = vmatprep.subr.mxu0 0.0
    %228 = vmatpush1.xpose.msra.mxu0 0.0
    %229 = vmatprep.subr.mxu0 0.0
    %230 = vmatpush1.xpose.msra.mxu0 0.0
    %231 = vmatprep.subr.mxu0 0.0
    %232 = vmatpush1.xpose.msra.mxu0 0.0
    %233 = vmatprep.subr.mxu0 0.0
    %234 = vmatpush1.xpose.msra.mxu0 0.0
    %235 = vmatprep.subr.mxu0 0.0
    %236 = vmatpush1.xpose.msra.mxu0 0.0
    %237 = vmatprep.subr.mxu0 0.0
    %238 = vmatpush1.xpose.msra.mxu0 0.0
    %239 = vmatprep.subr.mxu0 0.0
    %240 = vmatpush1.xpose.msra.mxu0 0.0
    %241 = vmatprep.subr.mxu0 0.0
    %242 = vmatpush1.xpose.msra.mxu0 0.0
    %243 = vmatprep.subr.mxu0 0.0
    %244 = vmatpush1.xpose.msra.mxu0 0.0
    %245 = vmatprep.subr.mxu0 0.0
    %246 = vmatpush1.xpose.msra.mxu0 0.0
    %247 = vmatprep.subr.mxu0 0.0
    %248 = vmatpush1.xpose.msra.mxu0 0.0
    %249 = vmatprep.subr.mxu0 0.0
    %250 = vmatpush1.xpose.msra.mxu0 0.0
    %251 = vmatprep.subr.mxu0 0.0
    %252 = vmatpush1.xpose.msra.mxu0 0.0
    %253 = vmatprep.subr.mxu0 0.0
    %254 = vmatpush1.xpose.msra.mxu0 0.0
    %255 = vmatprep.subr.mxu0 0.0
    %256 = vmatpush1.xpose.msra.mxu0 0.0
    %257 = vmatprep.subr.mxu0 0.0
    %258 = vmatpush1.xpose.msra.mxu0 0.0
    %259 = vmatprep.subr.mxu0 0.0
    %260 = vmatpush1.xpose.msra.mxu0 0.0
    %261 = vmatprep.subr.mxu0 0.0
    %262 = vmatpush1.xpose.msra.mxu0 0.0
    %263 = vmatprep.subr.mxu0 0.0
    %264 = vmatpush1.xpose.msra.mxu0 0.0
    %265 = vmatprep.subr.mxu0 0.0
    %266 = vmatpush1.xpose.msra.mxu0 0.0
    %267 = vmatprep.subr.mxu0 0.0
    %268 = vmatpush1.xpose.msra.mxu0 0.0
    %269 = vmatprep.subr.mxu0 0.0
    %270 = vmatpush1.xpose.msra.mxu0 0.0
    %271 = vmatprep.subr.mxu0 0.0
    %272 = vmatpush1.xpose.msra.mxu0 0.0
    %273 = vmatprep.subr.mxu0 0.0
    %274 = vmatpush1.xpose.msra.mxu0 0.0
    %275 = vmatprep.subr.mxu0 0.0
    %276 = vmatpush1.xpose.msra.mxu0 0.0
    %277 = vmatprep.subr.mxu0 0.0
    %278 = vmatpush1.xpose.msra.mxu0 0.0
    %279 = vmatprep.subr.mxu0 0.0
    %280 = vmatpush1.xpose.msra.mxu0 0.0
    %281 = vmatprep.mubr.f32.mxu0 0.0
    %282 = vmatmul.mubr.f32.gmra.mrb[0].mxu0 %v213
    %v283 = vpop.f32.mrb[0].mxu0
    %v284 = vadd.f32 0.0, %v283
    %v285 = vpop.f32.mrb[0].mxu0
    %286 = vdwg.mxu0
    %v287 = vmul.f32 %v207, 0.25
    %v288 = vmul.f32 %v284, 0.25
    %v289 = vadd.f32 %v287, %v126
    %v290 = vadd.f32 %v288, %v127
    %vm291 = vcmask 64512
    %v292 = vsel %vm291, %v289, -inf
    %293 = vmax.xlane.f32.xlu0 %v292
    %v294 = vpop.xlane.xlu0 %293
    %v295 = vsel %vm291, %v290, -inf
    %296 = vmax.xlane.f32.xlu0 %v295
    %v297 = vpop.xlane.xlu0 %296
    %v298 = vsub.f32 %v289, %v294
    %v299 = vsub.f32 %v290, %v297
    %v300 = vmul.f32 %v298, 1.442695
    %v301 = vpow.pop %v300
    %v302 = vmul.f32 %v299, 1.442695
    %v303 = vpow.pop %v302
    %v304 = vsel %vm291, %v301, 0.0
    %305 = vadd.xlane.f32.xlu0 %v304
    %v306 = vpop.xlane.xlu0 %305
    %v307 = vsel %vm291, %v303, 0.0
    %308 = vadd.xlane.f32.xlu0 %v307
    %v309 = vpop.xlane.xlu0 %308
    %v310 = vrcp.pop %v306
    %v311 = vrcp.pop %v309
    %v312 = vmul.f32 %v301, %v310
    %v313 = vmul.f32 %v303, %v311
    %314 = vrot.lane.b32.xlu0 %v118, 64
    %v315 = vpop.permute.xlu0 %314
    %v318 = vsel %vm291, %v312, 0
    %320 = vmatprep.subr.mxu0 0.0
    %321 = vmatpush1.msra.mxu0 %v315
    %322 = vmatprep.subr.mxu0 0.0
    %323 = vmatpush1.msra.mxu0 0.0
    %324 = vmatprep.subr.mxu0 0.0
    %325 = vmatpush1.msra.mxu0 0.0
    %326 = vmatprep.subr.mxu0 0.0
    %327 = vmatpush1.msra.mxu0 0.0
    %328 = vmatprep.subr.mxu0 0.0
    %329 = vmatpush1.msra.mxu0 0.0
    %330 = vmatprep.subr.mxu0 0.0
    %331 = vmatpush1.msra.mxu0 0.0
    %332 = vmatprep.subr.mxu0 0.0
    %333 = vmatpush1.msra.mxu0 0.0
    %334 = vmatprep.subr.mxu0 0.0
    %335 = vmatpush1.msra.mxu0 0.0
    %336 = vmatprep.subr.mxu0 0.0
    %337 = vmatpush1.msra.mxu0 0.0
    %338 = vmatprep.subr.mxu0 0.0
    %339 = vmatpush1.msra.mxu0 0.0
    %340 = vmatprep.subr.mxu0 0.0
    %341 = vmatpush1.msra.mxu0 0.0
    %342 = vmatprep.subr.mxu0 0.0
    %343 = vmatpush1.msra.mxu0 0.0
    %344 = vmatprep.subr.mxu0 0.0
    %345 = vmatpush1.msra.mxu0 0.0
    %346 = vmatprep.subr.mxu0 0.0
    %347 = vmatpush1.msra.mxu0 0.0
    %348 = vmatprep.subr.mxu0 0.0
    %349 = vmatpush1.msra.mxu0 0.0
    %350 = vmatprep.subr.mxu0 0.0
    %351 = vmatpush1.msra.mxu0 0.0
    %352 = vmatprep.subr.mxu0 0.0
    %353 = vmatpush1.msra.mxu0 0.0
    %354 = vmatprep.subr.mxu0 0.0
    %355 = vmatpush1.msra.mxu0 0.0
    %356 = vmatprep.subr.mxu0 0.0
    %357 = vmatpush1.msra.mxu0 0.0
    %358 = vmatprep.subr.mxu0 0.0
    %359 = vmatpush1.msra.mxu0 0.0
    %360 = vmatprep.subr.mxu0 0.0
    %361 = vmatpush1.msra.mxu0 0.0
    %362 = vmatprep.subr.mxu0 0.0
    %363 = vmatpush1.msra.mxu0 0.0
    %364 = vmatprep.subr.mxu0 0.0
    %365 = vmatpush1.msra.mxu0 0.0
    %366 = vmatprep.subr.mxu0 0.0
    %367 = vmatpush1.msra.mxu0 0.0
    %368 = vmatprep.subr.mxu0 0.0
    %369 = vmatpush1.msra.mxu0 0.0
    %370 = vmatprep.subr.mxu0 0.0
    %371 = vmatpush1.msra.mxu0 0.0
    %372 = vmatprep.subr.mxu0 0.0
    %373 = vmatpush1.msra.mxu0 0.0
    %374 = vmatprep.subr.mxu0 0.0
    %375 = vmatpush1.msra.mxu0 0.0
    %376 = vmatprep.subr.mxu0 0.0
    %377 = vmatpush1.msra.mxu0 0.0
    %378 = vmatprep.subr.mxu0 0.0
    %379 = vmatpush1.msra.mxu0 0.0
    %380 = vmatprep.subr.mxu0 0.0
    %381 = vmatpush1.msra.mxu0 0.0
    %382 = vmatprep.subr.mxu0 0.0
    %383 = vmatpush1.msra.mxu0 0.0
    %384 = vmatprep.mubr.f32.mxu0 0.0
    %385 = vmatmul.mubr.f32.gmra.mrb[0].mxu0 %v318
    %v386 = vpop.f32.mrb[0].mxu0
    %v387 = vadd.f32 0.0, %v386
    %v388 = vpop.f32.mrb[0].mxu0
    %389 = vdwg.mxu0
    %390 = vrot.lane.b32.xlu0 %v123, 64
    %v391 = vpop.permute.xlu0 %390
    %v394 = vsel %vm291, %v313, 0
    %396 = vmatprep.subr.mxu0 0.0
    %397 = vmatpush1.msra.mxu0 %v391
    %398 = vmatprep.subr.mxu0 0.0
    %399 = vmatpush1.msra.mxu0 0.0
    %400 = vmatprep.subr.mxu0 0.0
    %401 = vmatpush1.msra.mxu0 0.0
    %402 = vmatprep.subr.mxu0 0.0
    %403 = vmatpush1.msra.mxu0 0.0
    %404 = vmatprep.subr.mxu0 0.0
    %405 = vmatpush1.msra.mxu0 0.0
    %406 = vmatprep.subr.mxu0 0.0
    %407 = vmatpush1.msra.mxu0 0.0
    %408 = vmatprep.subr.mxu0 0.0
    %409 = vmatpush1.msra.mxu0 0.0
    %410 = vmatprep.subr.mxu0 0.0
    %411 = vmatpush1.msra.mxu0 0.0
    %412 = vmatprep.subr.mxu0 0.0
    %413 = vmatpush1.msra.mxu0 0.0
    %414 = vmatprep.subr.mxu0 0.0
    %415 = vmatpush1.msra.mxu0 0.0
    %416 = vmatprep.subr.mxu0 0.0
    %417 = vmatpush1.msra.mxu0 0.0
    %418 = vmatprep.subr.mxu0 0.0
    %419 = vmatpush1.msra.mxu0 0.0
    %420 = vmatprep.subr.mxu0 0.0
    %421 = vmatpush1.msra.mxu0 0.0
    %422 = vmatprep.subr.mxu0 0.0
    %423 = vmatpush1.msra.mxu0 0.0
    %424 = vmatprep.subr.mxu0 0.0
    %425 = vmatpush1.msra.mxu0 0.0
    %426 = vmatprep.subr.mxu0 0.0
    %427 = vmatpush1.msra.mxu0 0.0
    %428 = vmatprep.subr.mxu0 0.0
    %429 = vmatpush1.msra.mxu0 0.0
    %430 = vmatprep.subr.mxu0 0.0
    %431 = vmatpush1.msra.mxu0 0.0
    %432 = vmatprep.subr.mxu0 0.0
    %433 = vmatpush1.msra.mxu0 0.0
    %434 = vmatprep.subr.mxu0 0.0
    %435 = vmatpush1.msra.mxu0 0.0
    %436 = vmatprep.subr.mxu0 0.0
    %437 = vmatpush1.msra.mxu0 0.0
    %438 = vmatprep.subr.mxu0 0.0
    %439 = vmatpush1.msra.mxu0 0.0
    %440 = vmatprep.subr.mxu0 0.0
    %441 = vmatpush1.msra.mxu0 0.0
    %442 = vmatprep.subr.mxu0 0.0
    %443 = vmatpush1.msra.mxu0 0.0
    %444 = vmatprep.subr.mxu0 0.0
    %445 = vmatpush1.msra.mxu0 0.0
    %446 = vmatprep.subr.mxu0 0.0
    %447 = vmatpush1.msra.mxu0 0.0
    %448 = vmatprep.subr.mxu0 0.0
    %449 = vmatpush1.msra.mxu0 0.0
    %450 = vmatprep.subr.mxu0 0.0
    %451 = vmatpush1.msra.mxu0 0.0
    %452 = vmatprep.subr.mxu0 0.0
    %453 = vmatpush1.msra.mxu0 0.0
    %454 = vmatprep.subr.mxu0 0.0
    %455 = vmatpush1.msra.mxu0 0.0
    %456 = vmatprep.subr.mxu0 0.0
    %457 = vmatpush1.msra.mxu0 0.0
    %458 = vmatprep.subr.mxu0 0.0
    %459 = vmatpush1.msra.mxu0 0.0
    %460 = vmatprep.mubr.f32.mxu0 0.0
    %461 = vmatmul.mubr.f32.gmra.mrb[0].mxu0 %v394
    %v462 = vpop.f32.mrb[0].mxu0
    %v463 = vadd.f32 0.0, %v462
    %v464 = vpop.f32.mrb[0].mxu0
    %465 = vdwg.mxu0
    %v466 = vld [vmem:[#allocation2 + $0x80] sm:$0xff]
    %v467 = vld [vmem:[#allocation2 + $0x88] sm:$0xff]
    %v469 = vsel %vm135, %v387, 0
    %v472 = vsel %vm135, %v463, 0
    %474 = vmatprep.subr.mxu0 0.0
    %475 = vmatpush1.msra.mxu0 %v466
    %476 = vmatprep.subr.mxu0 0.0
    %477 = vmatpush1.msra.mxu0 %v467
    %478 = vmatprep.subr.mxu0 0.0
    %479 = vmatpush1.msra.mxu0 0.0
    %480 = vmatprep.subr.mxu0 0.0
    %481 = vmatpush1.msra.mxu0 0.0
    %482 = vmatprep.subr.mxu0 0.0
    %483 = vmatpush1.msra.mxu0 0.0
    %484 = vmatprep.subr.mxu0 0.0
    %485 = vmatpush1.msra.mxu0 0.0
    %486 = vmatprep.subr.mxu0 0.0
    %487 = vmatpush1.msra.mxu0 0.0
    %488 = vmatprep.subr.mxu0 0.0
    %489 = vmatpush1.msra.mxu0 0.0
    %490 = vmatprep.subr.mxu0 0.0
    %491 = vmatpush1.msra.mxu0 0.0
    %492 = vmatprep.subr.mxu0 0.0
    %493 = vmatpush1.msra.mxu0 0.0
    %494 = vmatprep.subr.mxu0 0.0
    %495 = vmatpush1.msra.mxu0 0.0
    %496 = vmatprep.subr.mxu0 0.0
    %497 = vmatpush1.msra.mxu0 0.0
    %498 = vmatprep.subr.mxu0 0.0
    %499 = vmatpush1.msra.mxu0 0.0
    %500 = vmatprep.subr.mxu0 0.0
    %501 = vmatpush1.msra.mxu0 0.0
    %502 = vmatprep.subr.mxu0 0.0
    %503 = vmatpush1.msra.mxu0 0.0
    %504 = vmatprep.subr.mxu0 0.0
    %505 = vmatpush1.msra.mxu0 0.0
    %506 = vmatprep.subr.mxu0 0.0
    %507 = vmatpush1.msra.mxu0 0.0
    %508 = vmatprep.subr.mxu0 0.0
    %509 = vmatpush1.msra.mxu0 0.0
    %510 = vmatprep.subr.mxu0 0.0
    %511 = vmatpush1.msra.mxu0 0.0
    %512 = vmatprep.subr.mxu0 0.0
    %513 = vmatpush1.msra.mxu0 0.0
    %514 = vmatprep.subr.mxu0 0.0
    %515 = vmatpush1.msra.mxu0 0.0
    %516 = vmatprep.subr.mxu0 0.0
    %517 = vmatpush1.msra.mxu0 0.0
    %518 = vmatprep.subr.mxu0 0.0
    %519 = vmatpush1.msra.mxu0 0.0
    %520 = vmatprep.subr.mxu0 0.0
    %521 = vmatpush1.msra.mxu0 0.0
    %522 = vmatprep.subr.mxu0 0.0
    %523 = vmatpush1.msra.mxu0 0.0
    %524 = vmatprep.subr.mxu0 0.0
    %525 = vmatpush1.msra.mxu0 0.0
    %526 = vmatprep.subr.mxu0 0.0
    %527 = vmatpush1.msra.mxu0 0.0
    %528 = vmatprep.subr.mxu0 0.0
    %529 = vmatpush1.msra.mxu0 0.0
    %530 = vmatprep.subr.mxu0 0.0
    %531 = vmatpush1.msra.mxu0 0.0
    %532 = vmatprep.subr.mxu0 0.0
    %533 = vmatpush1.msra.mxu0 0.0
    %534 = vmatprep.subr.mxu0 0.0
    %535 = vmatpush1.msra.mxu0 0.0
    %536 = vmatprep.subr.mxu0 0.0
    %537 = vmatpush1.msra.mxu0 0.0
    %538 = vmatprep.mubr.f32.mxu0 0.0
    %539 = vmatmul.mubr.f32.gmra.mrb[0].mxu0 %v469
    %v540 = vpop.f32.mrb[0].mxu0
    %v541 = vadd.f32 0.0, %v540
    %v542 = vpop.f32.mrb[0].mxu0
    %543 = vmatprep.mubr.f32.mxu0 0.0
    %544 = vmatmul.mubr.f32.gmra.mrb[0].mxu0 %v472
    %v545 = vpop.f32.mrb[0].mxu0
    %v546 = vadd.f32 0.0, %v545
    %v547 = vpop.f32.mrb[0].mxu0
    %548 = vdwg.mxu0
    %v549 = vadd.f32 %v131, %v541
    %v550 = vadd.f32 %v131, %v546
    %551 = vrot.lane.b32.xlu0 %v118, 112
    %v552 = vpop.permute.xlu0 %551
    %553 = vrot.lane.b32.xlu0 %v118, 80
    %v554 = vpop.permute.xlu0 %553
    %v555 = vsel %vm135, %v552, 0
    %v557 = vsel %vm135, %v554, 0
    %559 = vmatprep.subr.mxu0 0.0
    %560 = vmatpush1.xpose.msra.mxu0 %v557
    %561 = vmatprep.subr.mxu0 0.0
    %562 = vmatpush1.xpose.msra.mxu0 0.0
    %563 = vmatprep.subr.mxu0 0.0
    %564 = vmatpush1.xpose.msra.mxu0 0.0
    %565 = vmatprep.subr.mxu0 0.0
    %566 = vmatpush1.xpose.msra.mxu0 0.0
    %567 = vmatprep.subr.mxu0 0.0
    %568 = vmatpush1.xpose.msra.mxu0 0.0
    %569 = vmatprep.subr.mxu0 0.0
    %570 = vmatpush1.xpose.msra.mxu0 0.0
    %571 = vmatprep.subr.mxu0 0.0
    %572 = vmatpush1.xpose.msra.mxu0 0.0
    %573 = vmatprep.subr.mxu0 0.0
    %574 = vmatpush1.xpose.msra.mxu0 0.0
    %575 = vmatprep.subr.mxu0 0.0
    %576 = vmatpush1.xpose.msra.mxu0 0.0
    %577 = vmatprep.subr.mxu0 0.0
    %578 = vmatpush1.xpose.msra.mxu0 0.0
    %579 = vmatprep.subr.mxu0 0.0
    %580 = vmatpush1.xpose.msra.mxu0 0.0
    %581 = vmatprep.subr.mxu0 0.0
    %582 = vmatpush1.xpose.msra.mxu0 0.0
    %583 = vmatprep.subr.mxu0 0.0
    %584 = vmatpush1.xpose.msra.mxu0 0.0
    %585 = vmatprep.subr.mxu0 0.0
    %586 = vmatpush1.xpose.msra.mxu0 0.0
    %587 = vmatprep.subr.mxu0 0.0
    %588 = vmatpush1.xpose.msra.mxu0 0.0
    %589 = vmatprep.subr.mxu0 0.0
    %590 = vmatpush1.xpose.msra.mxu0 0.0
    %591 = vmatprep.subr.mxu0 0.0
    %592 = vmatpush1.xpose.msra.mxu0 0.0
    %593 = vmatprep.subr.mxu0 0.0
    %594 = vmatpush1.xpose.msra.mxu0 0.0
    %595 = vmatprep.subr.mxu0 0.0
    %596 = vmatpush1.xpose.msra.mxu0 0.0
    %597 = vmatprep.subr.mxu0 0.0
    %598 = vmatpush1.xpose.msra.mxu0 0.0
    %599 = vmatprep.subr.mxu0 0.0
    %600 = vmatpush1.xpose.msra.mxu0 0.0
    %601 = vmatprep.subr.mxu0 0.0
    %602 = vmatpush1.xpose.msra.mxu0 0.0
    %603 = vmatprep.subr.mxu0 0.0
    %604 = vmatpush1.xpose.msra.mxu0 0.0
    %605 = vmatprep.subr.mxu0 0.0
    %606 = vmatpush1.xpose.msra.mxu0 0.0
    %607 = vmatprep.subr.mxu0 0.0
    %608 = vmatpush1.xpose.msra.mxu0 0.0
    %609 = vmatprep.subr.mxu0 0.0
    %610 = vmatpush1.xpose.msra.mxu0 0.0
    %611 = vmatprep.subr.mxu0 0.0
    %612 = vmatpush1.xpose.msra.mxu0 0.0
    %613 = vmatprep.subr.mxu0 0.0
    %614 = vmatpush1.xpose.msra.mxu0 0.0
    %615 = vmatprep.subr.mxu0 0.0
    %616 = vmatpush1.xpose.msra.mxu0 0.0
    %617 = vmatprep.subr.mxu0 0.0
    %618 = vmatpush1.xpose.msra.mxu0 0.0
    %619 = vmatprep.subr.mxu0 0.0
    %620 = vmatpush1.xpose.msra.mxu0 0.0
    %621 = vmatprep.subr.mxu0 0.0
    %622 = vmatpush1.xpose.msra.mxu0 0.0
    %623 = vmatprep.mubr.f32.mxu0 0.0
    %624 = vmatmul.mubr.f32.gmra.mrb[0].mxu0 %v555
    %v625 = vpop.f32.mrb[0].mxu0
    %v626 = vadd.f32 0.0, %v625
    %v627 = vpop.f32.mrb[0].mxu0
    %628 = vdwg.mxu0
    %629 = vrot.lane.b32.xlu0 %v123, 112
    %v630 = vpop.permute.xlu0 %629
    %631 = vrot.lane.b32.xlu0 %v123, 80
    %v632 = vpop.permute.xlu0 %631
    %v633 = vsel %vm135, %v630, 0
    %v635 = vsel %vm135, %v632, 0
    %637 = vmatprep.subr.mxu0 0.0
    %638 = vmatpush1.xpose.msra.mxu0 %v635
    %639 = vmatprep.subr.mxu0 0.0
    %640 = vmatpush1.xpose.msra.mxu0 0.0
    %641 = vmatprep.subr.mxu0 0.0
    %642 = vmatpush1.xpose.msra.mxu0 0.0
    %643 = vmatprep.subr.mxu0 0.0
    %644 = vmatpush1.xpose.msra.mxu0 0.0
    %645 = vmatprep.subr.mxu0 0.0
    %646 = vmatpush1.xpose.msra.mxu0 0.0
    %647 = vmatprep.subr.mxu0 0.0
    %648 = vmatpush1.xpose.msra.mxu0 0.0
    %649 = vmatprep.subr.mxu0 0.0
    %650 = vmatpush1.xpose.msra.mxu0 0.0
    %651 = vmatprep.subr.mxu0 0.0
    %652 = vmatpush1.xpose.msra.mxu0 0.0
    %653 = vmatprep.subr.mxu0 0.0
    %654 = vmatpush1.xpose.msra.mxu0 0.0
    %655 = vmatprep.subr.mxu0 0.0
    %656 = vmatpush1.xpose.msra.mxu0 0.0
    %657 = vmatprep.subr.mxu0 0.0
    %658 = vmatpush1.xpose.msra.mxu0 0.0
    %659 = vmatprep.subr.mxu0 0.0
    %660 = vmatpush1.xpose.msra.mxu0 0.0
    %661 = vmatprep.subr.mxu0 0.0
    %662 = vmatpush1.xpose.msra.mxu0 0.0
    %663 = vmatprep.subr.mxu0 0.0
    %664 = vmatpush1.xpose.msra.mxu0 0.0
    %665 = vmatprep.subr.mxu0 0.0
    %666 = vmatpush1.xpose.msra.mxu0 0.0
    %667 = vmatprep.subr.mxu0 0.0
    %668 = vmatpush1.xpose.msra.mxu0 0.0
    %669 = vmatprep.subr.mxu0 0.0
    %670 = vmatpush1.xpose.msra.mxu0 0.0
    %671 = vmatprep.subr.mxu0 0.0
    %672 = vmatpush1.xpose.msra.mxu0 0.0
    %673 = vmatprep.subr.mxu0 0.0
    %674 = vmatpush1.xpose.msra.mxu0 0.0
    %675 = vmatprep.subr.mxu0 0.0
    %676 = vmatpush1.xpose.msra.mxu0 0.0
    %677 = vmatprep.subr.mxu0 0.0
    %678 = vmatpush1.xpose.msra.mxu0 0.0
    %679 = vmatprep.subr.mxu0 0.0
    %680 = vmatpush1.xpose.msra.mxu0 0.0
    %681 = vmatprep.subr.mxu0 0.0
    %682 = vmatpush1.xpose.msra.mxu0 0.0
    %683 = vmatprep.subr.mxu0 0.0
    %684 = vmatpush1.xpose.msra.mxu0 0.0
    %685 = vmatprep.subr.mxu0 0.0
    %686 = vmatpush1.xpose.msra.mxu0 0.0
    %687 = vmatprep.subr.mxu0 0.0
    %688 = vmatpush1.xpose.msra.mxu0 0.0
    %689 = vmatprep.subr.mxu0 0.0
    %690 = vmatpush1.xpose.msra.mxu0 0.0
    %691 = vmatprep.subr.mxu0 0.0
    %692 = vmatpush1.xpose.msra.mxu0 0.0
    %693 = vmatprep.subr.mxu0 0.0
    %694 = vmatpush1.xpose.msra.mxu0 0.0
    %695 = vmatprep.subr.mxu0 0.0
    %696 = vmatpush1.xpose.msra.mxu0 0.0
    %697 = vmatprep.subr.mxu0 0.0
    %698 = vmatpush1.xpose.msra.mxu0 0.0
    %699 = vmatprep.subr.mxu0 0.0
    %700 = vmatpush1.xpose.msra.mxu0 0.0
    %701 = vmatprep.mubr.f32.mxu0 0.0
    %702 = vmatmul.mubr.f32.gmra.mrb[0].mxu0 %v633
    %v703 = vpop.f32.mrb[0].mxu0
    %v704 = vadd.f32 0.0, %v703
    %v705 = vpop.f32.mrb[0].mxu0
    %706 = vdwg.mxu0
    %v707 = vmul.f32 %v626, 0.25
    %v708 = vmul.f32 %v704, 0.25
    %v709 = vadd.f32 %v707, %v126
    %v710 = vadd.f32 %v708, %v127
    %v711 = vsel %vm291, %v709, -inf
    %712 = vmax.xlane.f32.xlu0 %v711
    %v713 = vpop.xlane.xlu0 %712
    %v714 = vsel %vm291, %v710, -inf
    %715 = vmax.xlane.f32.xlu0 %v714
    %v716 = vpop.xlane.xlu0 %715
    %v717 = vsub.f32 %v709, %v713
    %v718 = vsub.f32 %v710, %v716
    %v719 = vmul.f32 %v717, 1.442695
    %v720 = vpow.pop %v719
    %v721 = vmul.f32 %v718, 1.442695
    %v722 = vpow.pop %v721
    %v723 = vsel %vm291, %v720, 0.0
    %724 = vadd.xlane.f32.xlu0 %v723
    %v725 = vpop.xlane.xlu0 %724
    %v726 = vsel %vm291, %v722, 0.0
    %727 = vadd.xlane.f32.xlu0 %v726
    %v728 = vpop.xlane.xlu0 %727
    %v729 = vrcp.pop %v725
    %v730 = vrcp.pop %v728
    %v731 = vmul.f32 %v720, %v729
    %v732 = vmul.f32 %v722, %v730
    %733 = vrot.lane.b32.xlu0 %v118, 48
    %v734 = vpop.permute.xlu0 %733
    %v737 = vsel %vm291, %v731, 0
    %739 = vmatprep.subr.mxu0 0.0
    %740 = vmatpush1.msra.mxu0 %v734
    %741 = vmatprep.subr.mxu0 0.0
    %742 = vmatpush1.msra.mxu0 0.0
    %743 = vmatprep.subr.mxu0 0.0
    %744 = vmatpush1.msra.mxu0 0.0
    %745 = vmatprep.subr.mxu0 0.0
    %746 = vmatpush1.msra.mxu0 0.0
    %747 = vmatprep.subr.mxu0 0.0
    %748 = vmatpush1.msra.mxu0 0.0
    %749 = vmatprep.subr.mxu0 0.0
    %750 = vmatpush1.msra.mxu0 0.0
    %751 = vmatprep.subr.mxu0 0.0
    %752 = vmatpush1.msra.mxu0 0.0
    %753 = vmatprep.subr.mxu0 0.0
    %754 = vmatpush1.msra.mxu0 0.0
    %755 = vmatprep.subr.mxu0 0.0
    %756 = vmatpush1.msra.mxu0 0.0
    %757 = vmatprep.subr.mxu0 0.0
    %758 = vmatpush1.msra.mxu0 0.0
    %759 = vmatprep.subr.mxu0 0.0
    %760 = vmatpush1.msra.mxu0 0.0
    %761 = vmatprep.subr.mxu0 0.0
    %762 = vmatpush1.msra.mxu0 0.0
    %763 = vmatprep.subr.mxu0 0.0
    %764 = vmatpush1.msra.mxu0 0.0
    %765 = vmatprep.subr.mxu0 0.0
    %766 = vmatpush1.msra.mxu0 0.0
    %767 = vmatprep.subr.mxu0 0.0
    %768 = vmatpush1.msra.mxu0 0.0
    %769 = vmatprep.subr.mxu0 0.0
    %770 = vmatpush1.msra.mxu0 0.0
    %771 = vmatprep.subr.mxu0 0.0
    %772 = vmatpush1.msra.mxu0 0.0
    %773 = vmatprep.subr.mxu0 0.0
    %774 = vmatpush1.msra.mxu0 0.0
    %775 = vmatprep.subr.mxu0 0.0
    %776 = vmatpush1.msra.mxu0 0.0
    %777 = vmatprep.subr.mxu0 0.0
    %778 = vmatpush1.msra.mxu0 0.0
    %779 = vmatprep.subr.mxu0 0.0
    %780 = vmatpush1.msra.mxu0 0.0
    %781 = vmatprep.subr.mxu0 0.0
    %782 = vmatpush1.msra.mxu0 0.0
    %783 = vmatprep.subr.mxu0 0.0
    %784 = vmatpush1.msra.mxu0 0.0
    %785 = vmatprep.subr.mxu0 0.0
    %786 = vmatpush1.msra.mxu0 0.0
    %787 = vmatprep.subr.mxu0 0.0
    %788 = vmatpush1.msra.mxu0 0.0
    %789 = vmatprep.subr.mxu0 0.0
    %790 = vmatpush1.msra.mxu0 0.0
    %791 = vmatprep.subr.mxu0 0.0
    %792 = vmatpush1.msra.mxu0 0.0
    %793 = vmatprep.subr.mxu0 0.0
    %794 = vmatpush1.msra.mxu0 0.0
    %795 = vmatprep.subr.mxu0 0.0
    %796 = vmatpush1.msra.mxu0 0.0
    %797 = vmatprep.subr.mxu0 0.0
    %798 = vmatpush1.msra.mxu0 0.0
    %799 = vmatprep.subr.mxu0 0.0
    %800 = vmatpush1.msra.mxu0 0.0
    %801 = vmatprep.subr.mxu0 0.0
    %802 = vmatpush1.msra.mxu0 0.0
    %803 = vmatprep.mubr.f32.mxu0 0.0
    %804 = vmatmul.mubr.f32.gmra.mrb[0].mxu0 %v737
    %v805 = vpop.f32.mrb[0].mxu0
    %v806 = vadd.f32 0.0, %v805
    %v807 = vpop.f32.mrb[0].mxu0
    %808 = vdwg.mxu0
    %809 = vrot.lane.b32.xlu0 %v123, 48
    %v810 = vpop.permute.xlu0 %809
    %v813 = vsel %vm291, %v732, 0
    %815 = vmatprep.subr.mxu0 0.0
    %816 = vmatpush1.msra.mxu0 %v810
    %817 = vmatprep.subr.mxu0 0.0
    %818 = vmatpush1.msra.mxu0 0.0
    %819 = vmatprep.subr.mxu0 0.0
    %820 = vmatpush1.msra.mxu0 0.0
    %821 = vmatprep.subr.mxu0 0.0
    %822 = vmatpush1.msra.mxu0 0.0
    %823 = vmatprep.subr.mxu0 0.0
    %824 = vmatpush1.msra.mxu0 0.0
    %825 = vmatprep.subr.mxu0 0.0
    %826 = vmatpush1.msra.mxu0 0.0
    %827 = vmatprep.subr.mxu0 0.0
    %828 = vmatpush1.msra.mxu0 0.0
    %829 = vmatprep.subr.mxu0 0.0
    %830 = vmatpush1.msra.mxu0 0.0
    %831 = vmatprep.subr.mxu0 0.0
    %832 = vmatpush1.msra.mxu0 0.0
    %833 = vmatprep.subr.mxu0 0.0
    %834 = vmatpush1.msra.mxu0 0.0
    %835 = vmatprep.subr.mxu0 0.0
    %836 = vmatpush1.msra.mxu0 0.0
    %837 = vmatprep.subr.mxu0 0.0
    %838 = vmatpush1.msra.mxu0 0.0
    %839 = vmatprep.subr.mxu0 0.0
    %840 = vmatpush1.msra.mxu0 0.0
    %841 = vmatprep.subr.mxu0 0.0
    %842 = vmatpush1.msra.mxu0 0.0
    %843 = vmatprep.subr.mxu0 0.0
    %844 = vmatpush1.msra.mxu0 0.0
    %845 = vmatprep.subr.mxu0 0.0
    %846 = vmatpush1.msra.mxu0 0.0
    %847 = vmatprep.subr.mxu0 0.0
    %848 = vmatpush1.msra.mxu0 0.0
    %849 = vmatprep.subr.mxu0 0.0
    %850 = vmatpush1.msra.mxu0 0.0
    %851 = vmatprep.subr.mxu0 0.0
    %852 = vmatpush1.msra.mxu0 0.0
    %853 = vmatprep.subr.mxu0 0.0
    %854 = vmatpush1.msra.mxu0 0.0
    %855 = vmatprep.subr.mxu0 0.0
    %856 = vmatpush1.msra.mxu0 0.0
    %857 = vmatprep.subr.mxu0 0.0
    %858 = vmatpush1.msra.mxu0 0.0
    %859 = vmatprep.subr.mxu0 0.0
    %860 = vmatpush1.msra.mxu0 0.0
    %861 = vmatprep.subr.mxu0 0.0
    %862 = vmatpush1.msra.mxu0 0.0
    %863 = vmatprep.subr.mxu0 0.0
    %864 = vmatpush1.msra.mxu0 0.0
    %865 = vmatprep.subr.mxu0 0.0
    %866 = vmatpush1.msra.mxu0 0.0
    %867 = vmatprep.subr.mxu0 0.0
    %868 = vmatpush1.msra.mxu0 0.0
    %869 = vmatprep.subr.mxu0 0.0
    %870 = vmatpush1.msra.mxu0 0.0
    %871 = vmatprep.subr.mxu0 0.0
    %872 = vmatpush1.msra.mxu0 0.0
    %873 = vmatprep.subr.mxu0 0.0
    %874 = vmatpush1.msra.mxu0 0.0
    %875 = vmatprep.subr.mxu0 0.0
    %876 = vmatpush1.msra.mxu0 0.0
    %877 = vmatprep.subr.mxu0 0.0
    %878 = vmatpush1.msra.mxu0 0.0
    %879 = vmatprep.mubr.f32.mxu0 0.0
    %880 = vmatmul.mubr.f32.gmra.mrb[0].mxu0 %v813
    %v881 = vpop.f32.mrb[0].mxu0
    %v882 = vadd.f32 0.0, %v881
    %v883 = vpop.f32.mrb[0].mxu0
    %884 = vdwg.mxu0
    %v885 = vld [vmem:[#allocation2 + $0x90] sm:$0xff]
    %v886 = vld [vmem:[#allocation2 + $0x98] sm:$0xff]
    %v888 = vsel %vm135, %v806, 0
    %v891 = vsel %vm135, %v882, 0
    %893 = vmatprep.subr.mxu0 0.0
    %894 = vmatpush1.msra.mxu0 %v885
    %895 = vmatprep.subr.mxu0 0.0
    %896 = vmatpush1.msra.mxu0 %v886
    %897 = vmatprep.subr.mxu0 0.0
    %898 = vmatpush1.msra.mxu0 0.0
    %899 = vmatprep.subr.mxu0 0.0
    %900 = vmatpush1.msra.mxu0 0.0
    %901 = vmatprep.subr.mxu0 0.0
    %902 = vmatpush1.msra.mxu0 0.0
    %903 = vmatprep.subr.mxu0 0.0
    %904 = vmatpush1.msra.mxu0 0.0
    %905 = vmatprep.subr.mxu0 0.0
    %906 = vmatpush1.msra.mxu0 0.0
    %907 = vmatprep.subr.mxu0 0.0
    %908 = vmatpush1.msra.mxu0 0.0
    %909 = vmatprep.subr.mxu0 0.0
    %910 = vmatpush1.msra.mxu0 0.0
    %911 = vmatprep.subr.mxu0 0.0
    %912 = vmatpush1.msra.mxu0 0.0
    %913 = vmatprep.subr.mxu0 0.0
    %914 = vmatpush1.msra.mxu0 0.0
    %915 = vmatprep.subr.mxu0 0.0
    %916 = vmatpush1.msra.mxu0 0.0
    %917 = vmatprep.subr.mxu0 0.0
    %918 = vmatpush1.msra.mxu0 0.0
    %919 = vmatprep.subr.mxu0 0.0
    %920 = vmatpush1.msra.mxu0 0.0
    %921 = vmatprep.subr.mxu0 0.0
    %922 = vmatpush1.msra.mxu0 0.0
    %923 = vmatprep.subr.mxu0 0.0
    %924 = vmatpush1.msra.mxu0 0.0
    %925 = vmatprep.subr.mxu0 0.0
    %926 = vmatpush1.msra.mxu0 0.0
    %927 = vmatprep.subr.mxu0 0.0
    %928 = vmatpush1.msra.mxu0 0.0
    %929 = vmatprep.subr.mxu0 0.0
    %930 = vmatpush1.msra.mxu0 0.0
    %931 = vmatprep.subr.mxu0 0.0
    %932 = vmatpush1.msra.mxu0 0.0
    %933 = vmatprep.subr.mxu0 0.0
    %934 = vmatpush1.msra.mxu0 0.0
    %935 = vmatprep.subr.mxu0 0.0
    %936 = vmatpush1.msra.mxu0 0.0
    %937 = vmatprep.subr.mxu0 0.0
    %938 = vmatpush1.msra.mxu0 0.0
    %939 = vmatprep.subr.mxu0 0.0
    %940 = vmatpush1.msra.mxu0 0.0
    %941 = vmatprep.subr.mxu0 0.0
    %942 = vmatpush1.msra.mxu0 0.0
    %943 = vmatprep.subr.mxu0 0.0
    %944 = vmatpush1.msra.mxu0 0.0
    %945 = vmatprep.subr.mxu0 0.0
    %946 = vmatpush1.msra.mxu0 0.0
    %947 = vmatprep.subr.mxu0 0.0
    %948 = vmatpush1.msra.mxu0 0.0
    %949 = vmatprep.subr.mxu0 0.0
    %950 = vmatpush1.msra.mxu0 0.0
    %951 = vmatprep.subr.mxu0 0.0
    %952 = vmatpush1.msra.mxu0 0.0
    %953 = vmatprep.subr.mxu0 0.0
    %954 = vmatpush1.msra.mxu0 0.0
    %955 = vmatprep.subr.mxu0 0.0
    %956 = vmatpush1.msra.mxu0 0.0
    %957 = vmatprep.mubr.f32.mxu0 0.0
    %958 = vmatmul.mubr.f32.gmra.mrb[0].mxu0 %v888
    %v959 = vpop.f32.mrb[0].mxu0
    %v960 = vadd.f32 0.0, %v959
    %v961 = vpop.f32.mrb[0].mxu0
    %962 = vmatprep.mubr.f32.mxu0 0.0
    %963 = vmatmul.mubr.f32.gmra.mrb[0].mxu0 %v891
    %v964 = vpop.f32.mrb[0].mxu0
    %v965 = vadd.f32 0.0, %v964
    %v966 = vpop.f32.mrb[0].mxu0
    %967 = vdwg.mxu0
    %v968 = vadd.f32 %v549, %v960
    %v969 = vadd.f32 %v550, %v965
    %v970 = vadd.f32 %v968, %v28
    %v971 = vadd.f32 %v969, %v29
    %972 = vadd.xlane.f32.xlu0 %v970
    %v973 = vpop.xlane.xlu0 %972
    %974 = vadd.xlane.f32.xlu0 %v971
    %v975 = vpop.xlane.xlu0 %974
    %v976 = vmul.f32 %v973, 0.03125
    %v977 = vmul.f32 %v975, 0.03125
    %v978 = vmul.f32 %v970, %v970
    %v979 = vmul.f32 %v971, %v971
    %980 = vadd.xlane.f32.xlu0 %v978
    %v981 = vpop.xlane.xlu0 %980
    %982 = vadd.xlane.f32.xlu0 %v979
    %v983 = vpop.xlane.xlu0 %982
    %v984 = vmul.f32 %v981, 0.03125
    %v985 = vmul.f32 %v983, 0.03125
    %v986 = vmul.f32 %v976, %v976
    %v987 = vmul.f32 %v977, %v977
    %v988 = vsub.f32 %v984, %v986
    %v989 = vsub.f32 %v985, %v987
    %v990 = vsub.f32 %v970, %v976
    %v991 = vsub.f32 %v971, %v977
    %v992 = vadd.f32 %v988, 1e-05
    %v993 = vadd.f32 %v989, 1e-05
    %v994 = vrsqrt.pop %v992
    %v995 = vrsqrt.pop %v993
    %v996 = vmul.f32 %v990, %v994
    %v997 = vmul.f32 %v991, %v995
    %v998 = vlaneseq
    %v999 = vshrl.u32 %v998, 7
    %v1000 = vsub.s32 2, %v999
    %v1001 = vrot.slane %v30, %v1000
    %v1002 = vmul.f32 %v996, %v1001
    %v1003 = vmul.f32 %v997, %v1001
    %v1004 = vlaneseq
    %v1005 = vshrl.u32 %v1004, 7
    %v1006 = vsub.s32 3, %v1005
    %v1007 = vrot.slane %v30, %v1006
    %v1008 = vadd.f32 %v1002, %v1007
    %v1009 = vadd.f32 %v1003, %v1007
    %v1010 = vld [vmem:[#allocation2 + $0xa0] sm:$0xff]
    %v1011 = vld [vmem:[#allocation2 + $0xa8] sm:$0xff]
    %v1012 = vld [vmem:[#allocation2 + $0xb0] sm:$0xff]
    %v1013 = vld [vmem:[#allocation2 + $0xb8] sm:$0xff]
    %v1014 = vld [vmem:[#allocation2 + $0xc0] sm:$0xff]
    %v1015 = vld [vmem:[#allocation2 + $0xc8] sm:$0xff]
    %v1016 = vld [vmem:[#allocation2 + $0xd0] sm:$0xff]
    %v1017 = vld [vmem:[#allocation2 + $0xd8] sm:$0xff]
    %v1018 = vld [vmem:[#allocation2 + $0xe0] sm:$0xff]
    %v1019 = vld [vmem:[#allocation2 + $0xe8] sm:$0xff]
    %v1020 = vld [vmem:[#allocation2 + $0xf0] sm:$0xff]
    %v1021 = vld [vmem:[#allocation2 + $0xf8] sm:$0xff]
    %v1022 = vld [vmem:[#allocation2 + $0x100] sm:$0xff]
    %v1023 = vld [vmem:[#allocation2 + $0x108] sm:$0xff]
    %v1024 = vld [vmem:[#allocation2 + $0x110] sm:$0xff]
    %v1025 = vld [vmem:[#allocation2 + $0x118] sm:$0xff]
    %v1026 = vlaneseq
    %v1027 = vshrl.u32 %v1026, 7
    %v1028 = vsub.s32 4, %v1027
    %v1029 = vrot.slane %v30, %v1028
    %1030 = vmatprep.subr.mxu0 0.0
    %1031 = vmatpush1.msra.mxu0 %v1010
    %1032 = vmatprep.subr.mxu0 0.0
    %1033 = vmatpush1.msra.mxu0 %v1011
    %1034 = vmatprep.subr.mxu0 0.0
    %1035 = vmatpush1.msra.mxu0 %v1012
    %1036 = vmatprep.subr.mxu0 0.0
    %1037 = vmatpush1.msra.mxu0 %v1013
    %1038 = vmatprep.subr.mxu0 0.0
    %1039 = vmatpush1.msra.mxu0 %v1014
    %1040 = vmatprep.subr.mxu0 0.0
    %1041 = vmatpush1.msra.mxu0 %v1015
    %1042 = vmatprep.subr.mxu0 0.0
    %1043 = vmatpush1.msra.mxu0 %v1016
    %1044 = vmatprep.subr.mxu0 0.0
    %1045 = vmatpush1.msra.mxu0 %v1017
    %1046 = vmatprep.subr.mxu0 0.0
    %1047 = vmatpush1.msra.mxu0 %v1018
    %1048 = vmatprep.subr.mxu0 0.0
    %1049 = vmatpush1.msra.mxu0 %v1019
    %1050 = vmatprep.subr.mxu0 0.0
    %1051 = vmatpush1.msra.mxu0 %v1020
    %1052 = vmatprep.subr.mxu0 0.0
    %1053 = vmatpush1.msra.mxu0 %v1021
    %1054 = vmatprep.subr.mxu0 0.0
    %1055 = vmatpush1.msra.mxu0 %v1022
    %1056 = vmatprep.subr.mxu0 0.0
    %1057 = vmatpush1.msra.mxu0 %v1023
    %1058 = vmatprep.subr.mxu0 0.0
    %1059 = vmatpush1.msra.mxu0 %v1024
    %1060 = vmatprep.subr.mxu0 0.0
    %1061 = vmatpush1.msra.mxu0 %v1025
    %1062 = vmatprep.subr.mxu0 0.0
    %1063 = vmatpush1.msra.mxu0 0.0
    %1064 = vmatprep.subr.mxu0 0.0
    %1065 = vmatpush1.msra.mxu0 0.0
    %1066 = vmatprep.subr.mxu0 0.0
    %1067 = vmatpush1.msra.mxu0 0.0
    %1068 = vmatprep.subr.mxu0 0.0
    %1069 = vmatpush1.msra.mxu0 0.0
    %1070 = vmatprep.subr.mxu0 0.0
    %1071 = vmatpush1.msra.mxu0 0.0
    %1072 = vmatprep.subr.mxu0 0.0
    %1073 = vmatpush1.msra.mxu0 0.0
    %1074 = vmatprep.subr.mxu0 0.0
    %1075 = vmatpush1.msra.mxu0 0.0
    %1076 = vmatprep.subr.mxu0 0.0
    %1077 = vmatpush1.msra.mxu0 0.0
    %1078 = vmatprep.subr.mxu0 0.0
    %1079 = vmatpush1.msra.mxu0 0.0
    %1080 = vmatprep.subr.mxu0 0.0
    %1081 = vmatpush1.msra.mxu0 0.0
    %1082 = vmatprep.subr.mxu0 0.0
    %1083 = vmatpush1.msra.mxu0 0.0
    %1084 = vmatprep.subr.mxu0 0.0
    %1085 = vmatpush1.msra.mxu0 0.0
    %1086 = vmatprep.subr.mxu0 0.0
    %1087 = vmatpush1.msra.mxu0 0.0
    %1088 = vmatprep.subr.mxu0 0.0
    %1089 = vmatpush1.msra.mxu0 0.0
    %1090 = vmatprep.subr.mxu0 0.0
    %1091 = vmatpush1.msra.mxu0 0.0
    %1092 = vmatprep.subr.mxu0 0.0
    %1093 = vmatpush1.msra.mxu0 0.0
    %1094 = vmatprep.mubr.f32.mxu0 0.0
    %1095 = vmatmul.mubr.f32.gmra.mrb[0].mxu0 %v1008
    %v1096 = vpop.f32.mrb[0].mxu0
    %v1097 = vadd.f32 %v1029, %v1096
    %v1098 = vpop.f32.mrb[0].mxu0
    %1099 = vmatprep.mubr.f32.mxu0 0.0
    %1100 = vmatmul.mubr.f32.gmra.mrb[0].mxu0 %v1009
    %v1101 = vpop.f32.mrb[0].mxu0
    %v1102 = vadd.f32 %v1029, %v1101
    %v1103 = vpop.f32.mrb[0].mxu0
    %1104 = vdwg.mxu0
    %v1105 = vmax.f32 %v1097, 0.0
    %v1106 = vmax.f32 %v1102, 0.0
    %v1107 = vld [vmem:[#allocation2 + $0x120] sm:$0xff]
    %v1108 = vld [vmem:[#allocation2 + $0x128] sm:$0xff]
    %v1109 = vld [vmem:[#allocation2 + $0x130] sm:$0xff]
    %v1110 = vld [vmem:[#allocation2 + $0x138] sm:$0xff]
    %v1111 = vld [vmem:[#allocation2 + $0x140] sm:$0xff]
    %v1112 = vld [vmem:[#allocation2 + $0x148] sm:$0xff]
    %v1113 = vld [vmem:[#allocation2 + $0x150] sm:$0xff]
    %v1114 = vld [vmem:[#allocation2 + $0x158] sm:$0xff]
    %v1115 = vld [vmem:[#allocation2 + $0x160] sm:$0xff]
    %v1116 = vld [vmem:[#allocation2 + $0x168] sm:$0xff]
    %v1117 = vld [vmem:[#allocation2 + $0x170] sm:$0xff]
    %v1118 = vld [vmem:[#allocation2 + $0x178] sm:$0xff]
    %v1119 = vld [vmem:[#allocation2 + $0x180] sm:$0xff]
    %v1120 = vld [vmem:[#allocation2 + $0x188] sm:$0xff]
    %v1121 = vld [vmem:[#allocation2 + $0x190] sm:$0xff]
    %v1122 = vld [vmem:[#allocation2 + $0x198] sm:$0xff]
    %v1123 = vlaneseq
    %v1124 = vshrl.u32 %v1123, 7
    %v1125 = vsub.s32 5, %v1124
    %v1126 = vrot.slane %v30, %v1125
    %1127 = vmatprep.subr.mxu0 0.0
    %1128 = vmatpush1.msra.mxu0 %v1107
    %1129 = vmatprep.subr.mxu0 0.0
    %1130 = vmatpush1.msra.mxu0 %v1108
    %1131 = vmatprep.subr.mxu0 0.0
    %1132 = vmatpush1.msra.mxu0 %v1109
    %1133 = vmatprep.subr.mxu0 0.0
    %1134 = vmatpush1.msra.mxu0 %v1110
    %1135 = vmatprep.subr.mxu0 0.0
    %1136 = vmatpush1.msra.mxu0 %v1111
    %1137 = vmatprep.subr.mxu0 0.0
    %1138 = vmatpush1.msra.mxu0 %v1112
    %1139 = vmatprep.subr.mxu0 0.0
    %1140 = vmatpush1.msra.mxu0 %v1113
    %1141 = vmatprep.subr.mxu0 0.0
    %1142 = vmatpush1.msra.mxu0 %v1114
    %1143 = vmatprep.subr.mxu0 0.0
    %1144 = vmatpush1.msra.mxu0 %v1115
    %1145 = vmatprep.subr.mxu0 0.0
    %1146 = vmatpush1.msra.mxu0 %v1116
    %1147 = vmatprep.subr.mxu0 0.0
    %1148 = vmatpush1.msra.mxu0 %v1117
    %1149 = vmatprep.subr.mxu0 0.0
    %1150 = vmatpush1.msra.mxu0 %v1118
    %1151 = vmatprep.subr.mxu0 0.0
    %1152 = vmatpush1.msra.mxu0 %v1119
    %1153 = vmatprep.subr.mxu0 0.0
    %1154 = vmatpush1.msra.mxu0 %v1120
    %1155 = vmatprep.subr.mxu0 0.0
    %1156 = vmatpush1.msra.mxu0 %v1121
    %1157 = vmatprep.subr.mxu0 0.0
    %1158 = vmatpush1.msra.mxu0 %v1122
    %1159 = vmatprep.subr.mxu0 0.0
    %1160 = vmatpush1.msra.mxu0 0.0
    %1161 = vmatprep.subr.mxu0 0.0
    %1162 = vmatpush1.msra.mxu0 0.0
    %1163 = vmatprep.subr.mxu0 0.0
    %1164 = vmatpush1.msra.mxu0 0.0
    %1165 = vmatprep.subr.mxu0 0.0
    %1166 = vmatpush1.msra.mxu0 0.0
    %1167 = vmatprep.subr.mxu0 0.0
    %1168 = vmatpush1.msra.mxu0 0.0
    %1169 = vmatprep.subr.mxu0 0.0
    %1170 = vmatpush1.msra.mxu0 0.0
    %1171 = vmatprep.subr.mxu0 0.0
    %1172 = vmatpush1.msra.mxu0 0.0
    %1173 = vmatprep.subr.mxu0 0.0
    %1174 = vmatpush1.msra.mxu0 0.0
    %1175 = vmatprep.subr.mxu0 0.0
    %1176 = vmatpush1.msra.mxu0 0.0
    %1177 = vmatprep.subr.mxu0 0.0
    %1178 = vmatpush1.msra.mxu0 0.0
    %1179 = vmatprep.subr.mxu0 0.0
    %1180 = vmatpush1.msra.mxu0 0.0
    %1181 = vmatprep.subr.mxu0 0.0
    %1182 = vmatpush1.msra.mxu0 0.0
    %1183 = vmatprep.subr.mxu0 0.0
    %1184 = vmatpush1.msra.mxu0 0.0
    %1185 = vmatprep.subr.mxu0 0.0
    %1186 = vmatpush1.msra.mxu0 0.0
    %1187 = vmatprep.subr.mxu0 0.0
    %1188 = vmatpush1.msra.mxu0 0.0
    %1189 = vmatprep.subr.mxu0 0.0
    %1190 = vmatpush1.msra.mxu0 0.0
    %1191 = vmatprep.mubr.f32.mxu0 0.0
    %1192 = vmatmul.mubr.f32.gmra.mrb[0].mxu0 %v1105
    %v1193 = vpop.f32.mrb[0].mxu0
    %v1194 = vadd.f32 %v1126, %v1193
    %v1195 = vpop.f32.mrb[0].mxu0
    %1196 = vmatprep.mubr.f32.mxu0 0.0
    %1197 = vmatmul.mubr.f32.gmra.mrb[0].mxu0 %v1106
    %v1198 = vpop.f32.mrb[0].mxu0
    %v1199 = vadd.f32 %v1126, %v1198
    %v1200 = vpop.f32.mrb[0].mxu0
    %1201 = vdwg.mxu0
    %v1202 = vadd.f32 %v1194, %v1008
    %v1203 = vadd.f32 %v1199, %v1009
    %1204 = vadd.xlane.f32.xlu0 %v1202
    %v1205 = vpop.xlane.xlu0 %1204
    %1206 = vadd.xlane.f32.xlu0 %v1203
    %v1207 = vpop.xlane.xlu0 %1206
    %v1208 = vmul.f32 %v1205, 0.03125
    %v1209 = vmul.f32 %v1207, 0.03125
    %v1210 = vmul.f32 %v1202, %v1202
    %v1211 = vmul.f32 %v1203, %v1203
    %1212 = vadd.xlane.f32.xlu0 %v1210
    %v1213 = vpop.xlane.xlu0 %1212
    %1214 = vadd.xlane.f32.xlu0 %v1211
    %v1215 = vpop.xlane.xlu0 %1214
    %v1216 = vmul.f32 %v1213, 0.03125
    %v1217 = vmul.f32 %v1215, 0.03125
    %v1218 = vmul.f32 %v1208, %v1208
    %v1219 = vmul.f32 %v1209, %v1209
    %v1220 = vsub.f32 %v1216, %v1218
    %v1221 = vsub.f32 %v1217, %v1219
    %v1222 = vsub.f32 %v1202, %v1208
    %v1223 = vsub.f32 %v1203, %v1209
    %v1224 = vadd.f32 %v1220, 1e-05
    %v1225 = vadd.f32 %v1221, 1e-05
    %v1226 = vrsqrt.pop %v1224
    %v1227 = vrsqrt.pop %v1225
    %v1228 = vmul.f32 %v1222, %v1226
    %v1229 = vmul.f32 %v1223, %v1227
    %v1230 = vlaneseq
    %v1231 = vshrl.u32 %v1230, 7
    %v1232 = vsub.s32 6, %v1231
    %v1233 = vrot.slane %v30, %v1232
    %v1234 = vmul.f32 %v1228, %v1233
    %v1235 = vmul.f32 %v1229, %v1233
    %v1236 = vlaneseq
    %v1237 = vshrl.u32 %v1236, 7
    %v1238 = vsub.s32 7, %v1237
    %v1239 = vrot.slane %v30, %v1238
    %v1240 = vadd.f32 %v1234, %v1239
    %v1241 = vadd.f32 %v1235, %v1239
    %1242 = vst [vmem:[%s3] sm:$0xff] %v1240
    %1243 = vst [vmem:[%s3 + $0x8] sm:$0xff] %v1241
    %1244 = vrot.lane.b32.xlu0 %v312, 32
    %v1245 = vpop.permute.xlu0 %1244
    %1246 = vrot.lane.b32.xlu0 %v313, 32
    %v1247 = vpop.permute.xlu0 %1246
    %vm1250 = vcmask 326912
    %1251 = vst.msk [vmem:[%s3] sm:$0xff] %vm1250, %v1245
    %1252 = vst.msk [vmem:[%s3 + $0x8] sm:$0xff] %vm1250, %v1247
    %1253 = vrot.lane.b32.xlu0 %v731, 40
    %v1254 = vpop.permute.xlu0 %1253
    %1255 = vrot.lane.b32.xlu0 %v732, 40
    %v1256 = vpop.permute.xlu0 %1255
    %vm1259 = vcmask 392512
    %1260 = vst.msk [vmem:[%s3] sm:$0xff] %vm1259, %v1254
    %1261 = vst.msk [vmem:[%s3 + $0x8] sm:$0xff] %vm1259, %v1256
    // Predicated region
    $region18: #{lora_decoder_forward.1} parent=1 // pred_check
      _
    $region19: #{lora_decoder_forward.1} parent=1 // pred_check_branch
      %1263 = sbr.rel (0) target = $region21
    $region20: #{lora_decoder_forward.1} parent=1 // pred_region
      _
    $region21: #{lora_decoder_forward.1} parent=1 // pred_fallthru
      _
    // Predicated region
    $region22: #{lora_decoder_forward.1} parent=1 // pred_check
      _
    $region23: #{lora_decoder_forward.1} parent=1 // pred_check_branch
      %1265 = sbr.rel (0) target = $region25
    $region24: #{lora_decoder_forward.1} parent=1 // pred_region
      _
    $region25: #{lora_decoder_forward.1} parent=1 // pred_fallthru
      _
    %1266 = vsyncpa [#allocation3], 1

</llo_original>
